<compile_context>
chip_gen: v5e
topology: v5e:2x2
jax: 0.10.0
libtpu: 0.0.40
codegen_flags: <defaults>
</compile_context>

<pallas_src>
import math
from functools import partial

import jax
import jax.numpy as jnp
from jax.experimental import pallas as pl
from jax.experimental.pallas import tpu as pltpu


# ----------------------------------------------------------------------------- kernel

def gpt2_stack_kernel(h0_ref, ln1g_ref, ln1b_ref, wqkv_ref, bqkv_ref, wao_ref, bao_ref,
                      ln2g_ref, ln2b_ref, wfc_ref, bfc_ref, wfp_ref, bfp_ref,
                      lnfg_ref, lnfb_ref,
                      out_ref, ctx_scr, copy_sem, *, n_head, batch, seq):
    layer = pl.program_id(0)
    last = pl.num_programs(0) - 1
    BT, C = out_ref.shape
    B, T, H = batch, seq, n_head
    Dh = C // H

    def layernorm(x, g, b):
        mu = jnp.mean(x, axis=-1, keepdims=True)
        var = jnp.mean(jnp.square(x - mu), axis=-1, keepdims=True)
        return (x - mu) * jax.lax.rsqrt(var + 1e-5) * g + b

    def gelu_new(x):  # GPT-2 "gelu_new"
        c = 0.7978845608028654  # sqrt(2/pi)
        return 0.5 * x * (1.0 + jnp.tanh(c * (x + 0.044715 * x * x * x)))

    # Layer 0: DMA the pre-added (inputs_embeds + wpe) hidden straight from HBM into the resident
    # output block.  The h0 HBM ref costs no resident VMEM on layers > 0.
    @pl.when(layer == 0)
    def _():
        cp = pltpu.make_async_copy(h0_ref, out_ref, copy_sem)
        cp.start()
        cp.wait()

    h = out_ref[...]                      # (B*T, C) f32 residual stream, resident across layers

    g1, b1 = ln1g_ref[0], ln1b_ref[0]
    g2, b2 = ln2g_ref[0], ln2b_ref[0]
    wqkv, bqkv = wqkv_ref[0], bqkv_ref[0]     # bf16 weight / f32 bias (Q scale folded offline)
    wao, bao = wao_ref[0], bao_ref[0]
    wfc, bfc = wfc_ref[0], bfc_ref[0]
    wfp, bfp = wfp_ref[0], bfp_ref[0]

    # ---- causal self-attention (1/sqrt(Dh) already folded into wqkv/bqkv Q columns) ----
    a_in = layernorm(h, g1, b1).astype(jnp.bfloat16)
    qkv = (jnp.dot(a_in, wqkv, preferred_element_type=jnp.float32) + bqkv
           ).astype(jnp.bfloat16)          # (B*T, 3C); single bf16 cast, no f32 q/k/v copies

    rows = jax.lax.broadcasted_iota(jnp.int32, (T, T), 0)
    cols = jax.lax.broadcasted_iota(jnp.int32, (T, T), 1)
    # (T, T) only — the `s + causal_bias` add broadcasts over the leading batch dim for free.
    causal_bias = jnp.where(rows >= cols, 0.0, -1e30).astype(jnp.float32)

    # Per-head attention.  Each head's context goes straight into the ctx scratch slab so that the
    # attention output projection is ONE (BT, C) x (C, C) matmul (full MXU contraction depth) and
    # no f32 accumulator / per-head c_proj row-slices stay live across the (static) head loop —
    # each iteration's values die at the scratch store, bounding vreg pressure.
    # TODO(synk): for production Dh=64, process heads in lane-aligned pairs (or pre-permute c_attn
    # to 128-lane head groups) to avoid masked sub-lane slices; and for long T switch this block
    # to a k-blocked online-softmax (flash-style) loop that skips fully-masked key blocks.
    for hh in range(H):
        q_h = qkv[:, hh * Dh:(hh + 1) * Dh].reshape(B, T, Dh)
        k_h = qkv[:, C + hh * Dh:C + (hh + 1) * Dh].reshape(B, T, Dh)
        v_h = qkv[:, 2 * C + hh * Dh:2 * C + (hh + 1) * Dh].reshape(B, T, Dh)
        s = jnp.einsum('bqd,bkd->bqk', q_h, k_h,
                       preferred_element_type=jnp.float32)            # (B, T, T) f32
        s = s + causal_bias
        s = s - jnp.max(s, axis=-1, keepdims=True)
        e = jnp.exp(s)
        p = e * pl.reciprocal(jnp.sum(e, axis=-1, keepdims=True), approx=True)
        ctx = jnp.einsum('bqk,bkd->bqd', p.astype(jnp.bfloat16), v_h,
                         preferred_element_type=jnp.float32)           # (B, T, Dh) f32
        ctx_scr[:, hh * Dh:(hh + 1) * Dh] = ctx.reshape(BT, Dh).astype(jnp.bfloat16)

    attn_out = jnp.dot(ctx_scr[...], wao, preferred_element_type=jnp.float32) + bao
    h = h + attn_out                                                    # resid dropout = identity

    # ---- MLP ----
    # TODO(synk): for production C on v7x (64 MiB VMEM), chunk the 4C dim (stream w_fc column /
    # w_fc_proj row blocks and accumulate proj) to bound the BT x 4C f32 activation.
    m_in = layernorm(h, g2, b2).astype(jnp.bfloat16)
    hfc = jnp.dot(m_in, wfc, preferred_element_type=jnp.float32) + bfc
    hfc = gelu_new(hfc)
    proj = jnp.dot(hfc.astype(jnp.bfloat16), wfp, preferred_element_type=jnp.float32) + bfp
    h = h + proj

    @pl.when(layer < last)
    def _():
        out_ref[...] = h

    @pl.when(layer == last)
    def _():
        out_ref[...] = layernorm(h, lnfg_ref[...], lnfb_ref[...])      # final ln_f in place


# ----------------------------------------------------------------------------- wrappers

def _pick_vmem_limit(B, T, C):
    """Coarse VMEM budget from actual shapes, clamped to a safe range.

    NOTE per-generation: ~96 MiB is fine on v5e/v6e (128 MiB physical); cap nearer 48-56 MiB on
    v7x (64 MiB physical) and enable the MLP 4C chunking there instead.  The demo config lands on
    the 32 MiB floor (identical to the default scoped limit on v6e/v7x).
    """
    BT = B * T
    weights_db = 2 * (12 * C * C) * 2                 # double-buffered bf16 per-layer weights
    resident = BT * C * 4 + BT * C * 2                # hidden (f32 out block) + ctx scratch (bf16)
    activs = BT * (3 * C) * 6 + BT * (4 * C) * 4 + B * T * T * 12
    est = int((weights_db + resident + activs) * 1.4) + (4 << 20)
    return min(max(est, 32 * 1024 * 1024), 96 * 1024 * 1024)


def gpt2_forward(x, params):
    """One GPT2Model forward pass (inputs_embeds path) on x (B, T, C); T must be mult of 16."""
    B, T, C = x.shape
    L, H = params['n_layer'], params['n_head']

    wpe = params['wpe']
    if wpe.shape[0] < T:
        # alignment-padding positions beyond n_positions use zero pos-embed; their rows are
        # discarded by the wrapper and never attended-from by valid rows (causal).
        wpe = jnp.concatenate([wpe, jnp.zeros((T - wpe.shape[0], C), wpe.dtype)], axis=0)

    # Pos-embed add hoisted to XLA (broadcast over B; no jnp.tile, embd dropout = identity).
    h0 = (x + wpe[:T][None, :, :]).reshape(B * T, C).astype(jnp.float32)

    out = pl.pallas_call(
        partial(gpt2_stack_kernel, n_head=H, batch=B, seq=T),
        out_shape=jax.ShapeDtypeStruct((B * T, C), jnp.float32),
        grid_spec=pltpu.PrefetchScalarGridSpec(
            num_scalar_prefetch=0,
            grid=(L,),
            in_specs=[
                pl.BlockSpec(memory_space=pl.ANY),                   # h0 in HBM; DMA'd at layer 0
                pl.BlockSpec((1, 1, C), lambda l: (l, 0, 0)),        # ln1 gamma
                pl.BlockSpec((1, 1, C), lambda l: (l, 0, 0)),        # ln1 beta
                pl.BlockSpec((1, C, 3 * C), lambda l: (l, 0, 0)),    # attn c_attn W (bf16)
                pl.BlockSpec((1, 1, 3 * C), lambda l: (l, 0, 0)),    # attn c_attn b
                pl.BlockSpec((1, C, C), lambda l: (l, 0, 0)),        # attn c_proj W (bf16)
                pl.BlockSpec((1, 1, C), lambda l: (l, 0, 0)),        # attn c_proj b
                pl.BlockSpec((1, 1, C), lambda l: (l, 0, 0)),        # ln2 gamma
                pl.BlockSpec((1, 1, C), lambda l: (l, 0, 0)),        # ln2 beta
                pl.BlockSpec((1, C, 4 * C), lambda l: (l, 0, 0)),    # mlp c_fc W (bf16)
                pl.BlockSpec((1, 1, 4 * C), lambda l: (l, 0, 0)),    # mlp c_fc b
                pl.BlockSpec((1, 4 * C, C), lambda l: (l, 0, 0)),    # mlp c_proj W (bf16)
                pl.BlockSpec((1, 1, C), lambda l: (l, 0, 0)),        # mlp c_proj b
                pl.BlockSpec((1, C), lambda l: (0, 0)),              # ln_f gamma
                pl.BlockSpec((1, C), lambda l: (0, 0)),              # ln_f beta
            ],
            out_specs=pl.BlockSpec((B * T, C), lambda l: (0, 0)),    # resident hidden state
            scratch_shapes=[pltpu.VMEM((B * T, C), jnp.bfloat16),    # per-layer ctx slab
                            pltpu.SemaphoreType.DMA(())],            # layer-0 h0 DMA sem
        ),
        compiler_params=pltpu.CompilerParams(
            # Layer axis carries the resident residual stream — must stay "arbitrary".
            dimension_semantics=("arbitrary",),
            vmem_limit_bytes=_pick_vmem_limit(B, T, C)),
    )(h0,
      params['ln1_g'], params['ln1_b'], params['w_qkv'], params['b_qkv'],
      params['w_attn_proj'], params['b_attn_proj'], params['ln2_g'], params['ln2_b'],
      params['w_fc'], params['b_fc'], params['w_fc_proj'], params['b_fc_proj'],
      params['lnf_g'], params['lnf_b'])
    return out.reshape(B, T, C)


def base_future_predictor_forward(feats, params, output_len=1):
    """BaseFuturePredictor.forward (encoder/decoder = Identity, output_attentions=False).

    The reference feeds last_hidden_state[:, -1:] back with past_key_values; causally this is
    identical to writing the predicted token at the next position of a fixed-length padded
    sequence and re-running, and the final run's hidden states equal the concatenated decoded
    outputs.  All runs share ONE static shape => one Mosaic compile for the whole generation.
    """
    # TODO(synk): output_attentions=True path (stacked per-layer attention maps) not implemented.
    # TODO(synk): a single-row KV-cache decode kernel for output_len > 1 would drop per-step cost
    # from a full O(T^2) re-forward to O(T); the fixed-length re-run kept here is semantically
    # identical.
    B, T, C = feats.shape
    T_out = T + output_len - 1
    n_pos = params['wpe'].shape[0]
    if T_out > n_pos:
        raise ValueError(f"T + output_len - 1 = {T_out} exceeds n_positions = {n_pos}")

    T_k = ((T_out + 15) // 16) * 16                      # bf16-sublane-aligned static length
    x = jnp.zeros((B, T_k, C), feats.dtype).at[:, :T, :].set(feats)
    hidden = gpt2_forward(x, params)
    for step in range(output_len - 1):
        t_new = T + step
        x = x.at[:, t_new:t_new + 1, :].set(hidden[:, t_new - 1:t_new, :])
        hidden = gpt2_forward(x, params)
    all_outputs_decoded = hidden[:, :T_out, :]           # decoder is Identity
    addl_endpoints = {}
    return all_outputs_decoded, addl_endpoints


# ----------------------------------------------------------------------------- params

def init_gpt2_params(key, n_embd, n_layer, n_head, n_positions):
    """Standard GPT-2-layout f32 parameters (as a checkpoint would provide them)."""
    C = n_embd
    ks = jax.random.split(key, 6)
    std = 0.02

    def nrm(k, shape):
        return jax.random.normal(k, shape, jnp.float32) * std

    return dict(
        n_layer=n_layer, n_head=n_head,
        wpe=nrm(ks[0], (n_positions, C)),
        ln1_g=jnp.ones((n_layer, 1, C), jnp.float32),
        ln1_b=jnp.zeros((n_layer, 1, C), jnp.float32),
        w_qkv=nrm(ks[1], (n_layer, C, 3 * C)),
        b_qkv=jnp.zeros((n_layer, 1, 3 * C), jnp.float32),
        w_attn_proj=nrm(ks[2], (n_layer, C, C)),
        b_attn_proj=jnp.zeros((n_layer, 1, C), jnp.float32),
        ln2_g=jnp.ones((n_layer, 1, C), jnp.float32),
        ln2_b=jnp.zeros((n_layer, 1, C), jnp.float32),
        w_fc=nrm(ks[3], (n_layer, C, 4 * C)),
        b_fc=jnp.zeros((n_layer, 1, 4 * C), jnp.float32),
        w_fc_proj=nrm(ks[4], (n_layer, 4 * C, C)),
        b_fc_proj=jnp.zeros((n_layer, 1, C), jnp.float32),
        lnf_g=jnp.ones((1, C), jnp.float32),
        lnf_b=jnp.zeros((1, C), jnp.float32),
    )


def prepare_gpt2_params(params):
    """Kernel-friendly transform: fold 1/sqrt(Dh) into the Q third of c_attn, and store the
    four big matmul weights in bf16 (kernel accumulates in f32)."""
    p = dict(params)
    C = p['wpe'].shape[1]
    scale = 1.0 / math.sqrt(C // p['n_head'])
    p['w_qkv'] = p['w_qkv'].at[:, :, 0:C].multiply(scale).astype(jnp.bfloat16)
    p['b_qkv'] = p['b_qkv'].at[:, :, 0:C].multiply(scale)
    for name in ('w_attn_proj', 'w_fc', 'w_fc_proj'):
        p[name] = p[name].astype(jnp.bfloat16)
    return p


# ----------------------------------------------------------------------------- main

if __name__ == "__main__":
    key = jax.random.PRNGKey(0)
    k_param, k_feat = jax.random.split(key)

    # NOTE: demo C=64 (< one lane width) produces masked partial stores; production C >= 128
    # is the representative configuration — do not benchmark this demo shape.
    B, T = 2, 8
    C = 64                 # in_features == inter_dim (Identity encoder/decoder path)
    n_layer, n_head = 2, 4
    output_len = 2

    params = prepare_gpt2_params(
        init_gpt2_params(k_param, C, n_layer, n_head, n_positions=32))
    feats = jax.random.normal(k_feat, (B, T, C), jnp.float32)

    out, endpoints = base_future_predictor_forward(feats, params, output_len=output_len)
    out = jax.block_until_ready(out)

    assert out.shape == (B, T + output_len - 1, C), out.shape
    assert endpoints == {}
    assert bool(jnp.all(jnp.isfinite(out)))
    print("KERNEL_OK")
</pallas_src>

<mosaic_0001>
module attributes {stable_mosaic.version = 11 : i64} {
  func.func @gpt2_stack_kernel(%arg0: i32, %arg1: memref<32x64xf32, #tpu.memory_space<any>>, %arg2: memref<1x1x64xf32, #tpu.memory_space<vmem>>, %arg3: memref<1x1x64xf32, #tpu.memory_space<vmem>>, %arg4: memref<1x64x192xbf16, #tpu.memory_space<vmem>>, %arg5: memref<1x1x192xf32, #tpu.memory_space<vmem>>, %arg6: memref<1x64x64xbf16, #tpu.memory_space<vmem>>, %arg7: memref<1x1x64xf32, #tpu.memory_space<vmem>>, %arg8: memref<1x1x64xf32, #tpu.memory_space<vmem>>, %arg9: memref<1x1x64xf32, #tpu.memory_space<vmem>>, %arg10: memref<1x64x256xbf16, #tpu.memory_space<vmem>>, %arg11: memref<1x1x256xf32, #tpu.memory_space<vmem>>, %arg12: memref<1x256x64xbf16, #tpu.memory_space<vmem>>, %arg13: memref<1x1x64xf32, #tpu.memory_space<vmem>>, %arg14: memref<1x64xf32, #tpu.memory_space<vmem>>, %arg15: memref<1x64xf32, #tpu.memory_space<vmem>>, %arg16: memref<32x64xf32, #tpu.memory_space<vmem>>, %arg17: memref<32x64xbf16, #tpu.memory_space<vmem>>, %arg18: memref<!tpu.dma_semaphore, #tpu.memory_space<semaphore_mem>>) attributes {dimension_semantics = [#tpu.dimension_semantics<arbitrary>], iteration_bounds = array<i64: 2>, scalar_prefetch = 0 : i64, scratch_operands = 2 : i64, tpu.core_type = #tpu.core_type<tc>, window_params = [{}, {transform_indices = @transform_1, window_bounds = array<i64: 1, 1, 64>}, {transform_indices = @transform_2, window_bounds = array<i64: 1, 1, 64>}, {transform_indices = @transform_3, window_bounds = array<i64: 1, 64, 192>}, {transform_indices = @transform_4, window_bounds = array<i64: 1, 1, 192>}, {transform_indices = @transform_5, window_bounds = array<i64: 1, 64, 64>}, {transform_indices = @transform_6, window_bounds = array<i64: 1, 1, 64>}, {transform_indices = @transform_7, window_bounds = array<i64: 1, 1, 64>}, {transform_indices = @transform_8, window_bounds = array<i64: 1, 1, 64>}, {transform_indices = @transform_9, window_bounds = array<i64: 1, 64, 256>}, {transform_indices = @transform_10, window_bounds = array<i64: 1, 1, 256>}, {transform_indices = @transform_11, window_bounds = array<i64: 1, 256, 64>}, {transform_indices = @transform_12, window_bounds = array<i64: 1, 1, 64>}, {pipeline_mode = #tpu.pipeline_mode<synchronous>, transform_indices = @transform_13, window_bounds = array<i64: 1, 64>}, {pipeline_mode = #tpu.pipeline_mode<synchronous>, transform_indices = @transform_14, window_bounds = array<i64: 1, 64>}, {pipeline_mode = #tpu.pipeline_mode<synchronous>, transform_indices = @transform_15, window_bounds = array<i64: 32, 64>}]} {
    %c0_i32 = arith.constant 0 : i32
    %0 = arith.cmpi eq, %arg0, %c0_i32 : i32
    %1 = arith.extui %0 : i1 to i32
    %c0_i32_0 = arith.constant 0 : i32
    %2 = arith.cmpi ne, %1, %c0_i32_0 : i32
    scf.if %2 {
      tpu.enqueue_dma source(%arg1 : memref<32x64xf32, #tpu.memory_space<any>>) target(%arg16 : memref<32x64xf32, #tpu.memory_space<vmem>>) target_semaphore(%arg18 : memref<!tpu.dma_semaphore, #tpu.memory_space<semaphore_mem>>)
      tpu.wait_dma2 semaphore(%arg18 : memref<!tpu.dma_semaphore, #tpu.memory_space<semaphore_mem>>) src(%arg1 : memref<32x64xf32, #tpu.memory_space<any>>) dst(%arg16 : memref<32x64xf32, #tpu.memory_space<vmem>>)
    } else {
    }
    %c0 = arith.constant 0 : index
    %c0_1 = arith.constant 0 : index
    %3 = vector.load %arg16[%c0, %c0_1] : memref<32x64xf32, #tpu.memory_space<vmem>>, vector<32x64xf32>
    %c0_2 = arith.constant 0 : index
    %c0_3 = arith.constant 0 : index
    %c0_4 = arith.constant 0 : index
    %4 = vector.load %arg2[%c0_2, %c0_3, %c0_4] : memref<1x1x64xf32, #tpu.memory_space<vmem>>, vector<1x1x64xf32>
    %5 = vector.shape_cast %4 : vector<1x1x64xf32> to vector<1x64xf32>
    %c0_5 = arith.constant 0 : index
    %c0_6 = arith.constant 0 : index
    %c0_7 = arith.constant 0 : index
    %6 = vector.load %arg3[%c0_5, %c0_6, %c0_7] : memref<1x1x64xf32, #tpu.memory_space<vmem>>, vector<1x1x64xf32>
    %7 = vector.shape_cast %6 : vector<1x1x64xf32> to vector<1x64xf32>
    %c0_8 = arith.constant 0 : index
    %c0_9 = arith.constant 0 : index
    %c0_10 = arith.constant 0 : index
    %8 = vector.load %arg8[%c0_8, %c0_9, %c0_10] : memref<1x1x64xf32, #tpu.memory_space<vmem>>, vector<1x1x64xf32>
    %9 = vector.shape_cast %8 : vector<1x1x64xf32> to vector<1x64xf32>
    %c0_11 = arith.constant 0 : index
    %c0_12 = arith.constant 0 : index
    %c0_13 = arith.constant 0 : index
    %10 = vector.load %arg9[%c0_11, %c0_12, %c0_13] : memref<1x1x64xf32, #tpu.memory_space<vmem>>, vector<1x1x64xf32>
    %11 = vector.shape_cast %10 : vector<1x1x64xf32> to vector<1x64xf32>
    %c0_14 = arith.constant 0 : index
    %c0_15 = arith.constant 0 : index
    %c0_16 = arith.constant 0 : index
    %12 = vector.load %arg4[%c0_14, %c0_15, %c0_16] : memref<1x64x192xbf16, #tpu.memory_space<vmem>>, vector<1x64x192xbf16>
    %13 = vector.shape_cast %12 : vector<1x64x192xbf16> to vector<64x192xbf16>
    %c0_17 = arith.constant 0 : index
    %c0_18 = arith.constant 0 : index
    %c0_19 = arith.constant 0 : index
    %14 = vector.load %arg5[%c0_17, %c0_18, %c0_19] : memref<1x1x192xf32, #tpu.memory_space<vmem>>, vector<1x1x192xf32>
    %15 = vector.shape_cast %14 : vector<1x1x192xf32> to vector<1x192xf32>
    %c0_20 = arith.constant 0 : index
    %c0_21 = arith.constant 0 : index
    %c0_22 = arith.constant 0 : index
    %16 = vector.load %arg6[%c0_20, %c0_21, %c0_22] : memref<1x64x64xbf16, #tpu.memory_space<vmem>>, vector<1x64x64xbf16>
    %17 = vector.shape_cast %16 : vector<1x64x64xbf16> to vector<64x64xbf16>
    %c0_23 = arith.constant 0 : index
    %c0_24 = arith.constant 0 : index
    %c0_25 = arith.constant 0 : index
    %18 = vector.load %arg7[%c0_23, %c0_24, %c0_25] : memref<1x1x64xf32, #tpu.memory_space<vmem>>, vector<1x1x64xf32>
    %19 = vector.shape_cast %18 : vector<1x1x64xf32> to vector<1x64xf32>
    %c0_26 = arith.constant 0 : index
    %c0_27 = arith.constant 0 : index
    %c0_28 = arith.constant 0 : index
    %20 = vector.load %arg10[%c0_26, %c0_27, %c0_28] : memref<1x64x256xbf16, #tpu.memory_space<vmem>>, vector<1x64x256xbf16>
    %21 = vector.shape_cast %20 : vector<1x64x256xbf16> to vector<64x256xbf16>
    %c0_29 = arith.constant 0 : index
    %c0_30 = arith.constant 0 : index
    %c0_31 = arith.constant 0 : index
    %22 = vector.load %arg11[%c0_29, %c0_30, %c0_31] : memref<1x1x256xf32, #tpu.memory_space<vmem>>, vector<1x1x256xf32>
    %23 = vector.shape_cast %22 : vector<1x1x256xf32> to vector<1x256xf32>
    %c0_32 = arith.constant 0 : index
    %c0_33 = arith.constant 0 : index
    %c0_34 = arith.constant 0 : index
    %24 = vector.load %arg12[%c0_32, %c0_33, %c0_34] : memref<1x256x64xbf16, #tpu.memory_space<vmem>>, vector<1x256x64xbf16>
    %25 = vector.shape_cast %24 : vector<1x256x64xbf16> to vector<256x64xbf16>
    %c0_35 = arith.constant 0 : index
    %c0_36 = arith.constant 0 : index
    %c0_37 = arith.constant 0 : index
    %26 = vector.load %arg13[%c0_35, %c0_36, %c0_37] : memref<1x1x64xf32, #tpu.memory_space<vmem>>, vector<1x1x64xf32>
    %27 = vector.shape_cast %26 : vector<1x1x64xf32> to vector<1x64xf32>
    %cst = arith.constant dense<0.000000e+00> : vector<32xf32>
    %28 = vector.multi_reduction <add>, %3, %cst [1] : vector<32x64xf32> to vector<32xf32>
    %29 = vector.shape_cast %28 : vector<32xf32> to vector<32x1xf32>
    %cst_38 = arith.constant 6.400000e+01 : f32
    %30 = vector.broadcast %cst_38 : f32 to vector<32x1xf32>
    %31 = arith.divf %29, %30 : vector<32x1xf32>
    %32 = vector.broadcast %31 : vector<32x1xf32> to vector<32x64xf32>
    %33 = arith.subf %3, %32 : vector<32x64xf32>
    %34 = arith.mulf %33, %33 : vector<32x64xf32>
    %cst_39 = arith.constant dense<0.000000e+00> : vector<32xf32>
    %35 = vector.multi_reduction <add>, %34, %cst_39 [1] : vector<32x64xf32> to vector<32xf32>
    %36 = vector.shape_cast %35 : vector<32xf32> to vector<32x1xf32>
    %cst_40 = arith.constant 6.400000e+01 : f32
    %37 = vector.broadcast %cst_40 : f32 to vector<32x1xf32>
    %38 = arith.divf %36, %37 : vector<32x1xf32>
    %39 = vector.broadcast %31 : vector<32x1xf32> to vector<32x64xf32>
    %40 = arith.subf %3, %39 : vector<32x64xf32>
    %cst_41 = arith.constant 9.99999974E-6 : f32
    %41 = vector.broadcast %cst_41 : f32 to vector<32x1xf32>
    %42 = arith.addf %38, %41 : vector<32x1xf32>
    %43 = math.rsqrt %42 : vector<32x1xf32>
    %44 = vector.broadcast %43 : vector<32x1xf32> to vector<32x64xf32>
    %45 = arith.mulf %40, %44 : vector<32x64xf32>
    %46 = vector.broadcast %5 : vector<1x64xf32> to vector<32x64xf32>
    %47 = arith.mulf %45, %46 : vector<32x64xf32>
    %48 = vector.broadcast %7 : vector<1x64xf32> to vector<32x64xf32>
    %49 = arith.addf %47, %48 : vector<32x64xf32>
    %50 = arith.truncf %49 : vector<32x64xf32> to vector<32x64xbf16>
    %cst_42 = arith.constant dense<0.000000e+00> : vector<32x192xf32>
    %51 = tpu.matmul %50, %13, %cst_42 {dimension_numbers = #tpu.dot_dimension_numbers<[1], [0], [0], [1], [0, 0, 1, 1], [], []>} : vector<32x64xbf16>, vector<64x192xbf16>, vector<32x192xf32> -> vector<32x192xf32>
    %52 = vector.broadcast %15 : vector<1x192xf32> to vector<32x192xf32>
    %53 = arith.addf %51, %52 : vector<32x192xf32>
    %54 = arith.truncf %53 : vector<32x192xf32> to vector<32x192xbf16>
    %55 = tpu.iota {dimensions = array<i32: 0>} : vector<16x16xi32>
    %56 = tpu.iota {dimensions = array<i32: 1>} : vector<16x16xi32>
    %57 = arith.cmpi sge, %55, %56 : vector<16x16xi32>
    %cst_43 = arith.constant 0.000000e+00 : f32
    %cst_44 = arith.constant -1.000000e+30 : f32
    %58 = vector.broadcast %cst_43 : f32 to vector<16x16xf32>
    %59 = vector.broadcast %cst_44 : f32 to vector<16x16xf32>
    %60 = arith.select %57, %58, %59 : vector<16x16xi1>, vector<16x16xf32>
    %61 = vector.extract_strided_slice %54 {offsets = [0, 0], sizes = [32, 16], strides = [1, 1]} : vector<32x192xbf16> to vector<32x16xbf16>
    %62 = vector.shape_cast %61 : vector<32x16xbf16> to vector<2x16x16xbf16>
    %63 = vector.extract_strided_slice %54 {offsets = [0, 64], sizes = [32, 16], strides = [1, 1]} : vector<32x192xbf16> to vector<32x16xbf16>
    %64 = vector.shape_cast %63 : vector<32x16xbf16> to vector<2x16x16xbf16>
    %65 = vector.extract_strided_slice %54 {offsets = [0, 128], sizes = [32, 16], strides = [1, 1]} : vector<32x192xbf16> to vector<32x16xbf16>
    %66 = vector.shape_cast %65 : vector<32x16xbf16> to vector<2x16x16xbf16>
    "tpu.trace_start"() <{level = 10 : i32, message = "bqd,bkd->bqk"}> : () -> ()
    %cst_45 = arith.constant dense<0.000000e+00> : vector<2x16x16xf32>
    %67 = tpu.matmul %62, %64, %cst_45 {dimension_numbers = #tpu.dot_dimension_numbers<[2], [2], [1], [1], [0, 0, 0, 1, 1, 1], [0], [0]>} : vector<2x16x16xbf16>, vector<2x16x16xbf16>, vector<2x16x16xf32> -> vector<2x16x16xf32>
    "tpu.trace_stop"() : () -> ()
    %68 = vector.shape_cast %60 : vector<16x16xf32> to vector<1x16x16xf32>
    %69 = vector.broadcast %68 : vector<1x16x16xf32> to vector<2x16x16xf32>
    %70 = arith.addf %67, %69 : vector<2x16x16xf32>
    %cst_46 = arith.constant dense<0xFF800000> : vector<2x16xf32>
    %71 = vector.multi_reduction <maximumf>, %70, %cst_46 [2] : vector<2x16x16xf32> to vector<2x16xf32>
    %72 = vector.shape_cast %71 : vector<2x16xf32> to vector<2x16x1xf32>
    %73 = vector.broadcast %72 : vector<2x16x1xf32> to vector<2x16x16xf32>
    %74 = arith.subf %70, %73 : vector<2x16x16xf32>
    %75 = math.exp %74 : vector<2x16x16xf32>
    %cst_47 = arith.constant dense<0.000000e+00> : vector<2x16xf32>
    %76 = vector.multi_reduction <add>, %75, %cst_47 [2] : vector<2x16x16xf32> to vector<2x16xf32>
    %77 = vector.shape_cast %76 : vector<2x16xf32> to vector<2x16x1xf32>
    %78 = tpu.reciprocal %77 {approx = true} : vector<2x16x1xf32> -> vector<2x16x1xf32>
    %79 = vector.broadcast %78 : vector<2x16x1xf32> to vector<2x16x16xf32>
    %80 = arith.mulf %75, %79 : vector<2x16x16xf32>
    %81 = arith.truncf %80 : vector<2x16x16xf32> to vector<2x16x16xbf16>
    "tpu.trace_start"() <{level = 10 : i32, message = "bqk,bkd->bqd"}> : () -> ()
    %cst_48 = arith.constant dense<0.000000e+00> : vector<2x16x16xf32>
    %82 = tpu.matmul %81, %66, %cst_48 {dimension_numbers = #tpu.dot_dimension_numbers<[2], [1], [1], [2], [0, 0, 0, 1, 1, 2], [0], [0]>} : vector<2x16x16xbf16>, vector<2x16x16xbf16>, vector<2x16x16xf32> -> vector<2x16x16xf32>
    "tpu.trace_stop"() : () -> ()
    %83 = vector.shape_cast %82 : vector<2x16x16xf32> to vector<32x16xf32>
    %84 = arith.truncf %83 : vector<32x16xf32> to vector<32x16xbf16>
    %c0_49 = arith.constant 0 : index
    %c0_50 = arith.constant 0 : index
    %85 = vector.load %arg17[%c0_49, %c0_50] : memref<32x64xbf16, #tpu.memory_space<vmem>>, vector<32x16xbf16>
    tpu.vector_store %arg17[%c0_49, %c0_50], %84 {strides = array<i32>} : memref<32x64xbf16, #tpu.memory_space<vmem>>, vector<32x16xbf16>,
    %86 = vector.extract_strided_slice %54 {offsets = [0, 16], sizes = [32, 16], strides = [1, 1]} : vector<32x192xbf16> to vector<32x16xbf16>
    %87 = vector.shape_cast %86 : vector<32x16xbf16> to vector<2x16x16xbf16>
    %88 = vector.extract_strided_slice %54 {offsets = [0, 80], sizes = [32, 16], strides = [1, 1]} : vector<32x192xbf16> to vector<32x16xbf16>
    %89 = vector.shape_cast %88 : vector<32x16xbf16> to vector<2x16x16xbf16>
    %90 = vector.extract_strided_slice %54 {offsets = [0, 144], sizes = [32, 16], strides = [1, 1]} : vector<32x192xbf16> to vector<32x16xbf16>
    %91 = vector.shape_cast %90 : vector<32x16xbf16> to vector<2x16x16xbf16>
    "tpu.trace_start"() <{level = 10 : i32, message = "bqd,bkd->bqk"}> : () -> ()
    %cst_51 = arith.constant dense<0.000000e+00> : vector<2x16x16xf32>
    %92 = tpu.matmul %87, %89, %cst_51 {dimension_numbers = #tpu.dot_dimension_numbers<[2], [2], [1], [1], [0, 0, 0, 1, 1, 1], [0], [0]>} : vector<2x16x16xbf16>, vector<2x16x16xbf16>, vector<2x16x16xf32> -> vector<2x16x16xf32>
    "tpu.trace_stop"() : () -> ()
    %93 = vector.shape_cast %60 : vector<16x16xf32> to vector<1x16x16xf32>
    %94 = vector.broadcast %93 : vector<1x16x16xf32> to vector<2x16x16xf32>
    %95 = arith.addf %92, %94 : vector<2x16x16xf32>
    %cst_52 = arith.constant dense<0xFF800000> : vector<2x16xf32>
    %96 = vector.multi_reduction <maximumf>, %95, %cst_52 [2] : vector<2x16x16xf32> to vector<2x16xf32>
    %97 = vector.shape_cast %96 : vector<2x16xf32> to vector<2x16x1xf32>
    %98 = vector.broadcast %97 : vector<2x16x1xf32> to vector<2x16x16xf32>
    %99 = arith.subf %95, %98 : vector<2x16x16xf32>
    %100 = math.exp %99 : vector<2x16x16xf32>
    %cst_53 = arith.constant dense<0.000000e+00> : vector<2x16xf32>
    %101 = vector.multi_reduction <add>, %100, %cst_53 [2] : vector<2x16x16xf32> to vector<2x16xf32>
    %102 = vector.shape_cast %101 : vector<2x16xf32> to vector<2x16x1xf32>
    %103 = tpu.reciprocal %102 {approx = true} : vector<2x16x1xf32> -> vector<2x16x1xf32>
    %104 = vector.broadcast %103 : vector<2x16x1xf32> to vector<2x16x16xf32>
    %105 = arith.mulf %100, %104 : vector<2x16x16xf32>
    %106 = arith.truncf %105 : vector<2x16x16xf32> to vector<2x16x16xbf16>
    "tpu.trace_start"() <{level = 10 : i32, message = "bqk,bkd->bqd"}> : () -> ()
    %cst_54 = arith.constant dense<0.000000e+00> : vector<2x16x16xf32>
    %107 = tpu.matmul %106, %91, %cst_54 {dimension_numbers = #tpu.dot_dimension_numbers<[2], [1], [1], [2], [0, 0, 0, 1, 1, 2], [0], [0]>} : vector<2x16x16xbf16>, vector<2x16x16xbf16>, vector<2x16x16xf32> -> vector<2x16x16xf32>
    "tpu.trace_stop"() : () -> ()
    %108 = vector.shape_cast %107 : vector<2x16x16xf32> to vector<32x16xf32>
    %109 = arith.truncf %108 : vector<32x16xf32> to vector<32x16xbf16>
    %c0_55 = arith.constant 0 : index
    %c16 = arith.constant 16 : index
    %110 = vector.load %arg17[%c0_55, %c16] : memref<32x64xbf16, #tpu.memory_space<vmem>>, vector<32x16xbf16>
    tpu.vector_store %arg17[%c0_55, %c16], %109 {strides = array<i32>} : memref<32x64xbf16, #tpu.memory_space<vmem>>, vector<32x16xbf16>,
    %111 = vector.extract_strided_slice %54 {offsets = [0, 32], sizes = [32, 16], strides = [1, 1]} : vector<32x192xbf16> to vector<32x16xbf16>
    %112 = vector.shape_cast %111 : vector<32x16xbf16> to vector<2x16x16xbf16>
    %113 = vector.extract_strided_slice %54 {offsets = [0, 96], sizes = [32, 16], strides = [1, 1]} : vector<32x192xbf16> to vector<32x16xbf16>
    %114 = vector.shape_cast %113 : vector<32x16xbf16> to vector<2x16x16xbf16>
    %115 = vector.extract_strided_slice %54 {offsets = [0, 160], sizes = [32, 16], strides = [1, 1]} : vector<32x192xbf16> to vector<32x16xbf16>
    %116 = vector.shape_cast %115 : vector<32x16xbf16> to vector<2x16x16xbf16>
    "tpu.trace_start"() <{level = 10 : i32, message = "bqd,bkd->bqk"}> : () -> ()
    %cst_56 = arith.constant dense<0.000000e+00> : vector<2x16x16xf32>
    %117 = tpu.matmul %112, %114, %cst_56 {dimension_numbers = #tpu.dot_dimension_numbers<[2], [2], [1], [1], [0, 0, 0, 1, 1, 1], [0], [0]>} : vector<2x16x16xbf16>, vector<2x16x16xbf16>, vector<2x16x16xf32> -> vector<2x16x16xf32>
    "tpu.trace_stop"() : () -> ()
    %118 = vector.shape_cast %60 : vector<16x16xf32> to vector<1x16x16xf32>
    %119 = vector.broadcast %118 : vector<1x16x16xf32> to vector<2x16x16xf32>
    %120 = arith.addf %117, %119 : vector<2x16x16xf32>
    %cst_57 = arith.constant dense<0xFF800000> : vector<2x16xf32>
    %121 = vector.multi_reduction <maximumf>, %120, %cst_57 [2] : vector<2x16x16xf32> to vector<2x16xf32>
    %122 = vector.shape_cast %121 : vector<2x16xf32> to vector<2x16x1xf32>
    %123 = vector.broadcast %122 : vector<2x16x1xf32> to vector<2x16x16xf32>
    %124 = arith.subf %120, %123 : vector<2x16x16xf32>
    %125 = math.exp %124 : vector<2x16x16xf32>
    %cst_58 = arith.constant dense<0.000000e+00> : vector<2x16xf32>
    %126 = vector.multi_reduction <add>, %125, %cst_58 [2] : vector<2x16x16xf32> to vector<2x16xf32>
    %127 = vector.shape_cast %126 : vector<2x16xf32> to vector<2x16x1xf32>
    %128 = tpu.reciprocal %127 {approx = true} : vector<2x16x1xf32> -> vector<2x16x1xf32>
    %129 = vector.broadcast %128 : vector<2x16x1xf32> to vector<2x16x16xf32>
    %130 = arith.mulf %125, %129 : vector<2x16x16xf32>
    %131 = arith.truncf %130 : vector<2x16x16xf32> to vector<2x16x16xbf16>
    "tpu.trace_start"() <{level = 10 : i32, message = "bqk,bkd->bqd"}> : () -> ()
    %cst_59 = arith.constant dense<0.000000e+00> : vector<2x16x16xf32>
    %132 = tpu.matmul %131, %116, %cst_59 {dimension_numbers = #tpu.dot_dimension_numbers<[2], [1], [1], [2], [0, 0, 0, 1, 1, 2], [0], [0]>} : vector<2x16x16xbf16>, vector<2x16x16xbf16>, vector<2x16x16xf32> -> vector<2x16x16xf32>
    "tpu.trace_stop"() : () -> ()
    %133 = vector.shape_cast %132 : vector<2x16x16xf32> to vector<32x16xf32>
    %134 = arith.truncf %133 : vector<32x16xf32> to vector<32x16xbf16>
    %c0_60 = arith.constant 0 : index
    %c32 = arith.constant 32 : index
    %135 = vector.load %arg17[%c0_60, %c32] : memref<32x64xbf16, #tpu.memory_space<vmem>>, vector<32x16xbf16>
    tpu.vector_store %arg17[%c0_60, %c32], %134 {strides = array<i32>} : memref<32x64xbf16, #tpu.memory_space<vmem>>, vector<32x16xbf16>,
    %136 = vector.extract_strided_slice %54 {offsets = [0, 48], sizes = [32, 16], strides = [1, 1]} : vector<32x192xbf16> to vector<32x16xbf16>
    %137 = vector.shape_cast %136 : vector<32x16xbf16> to vector<2x16x16xbf16>
    %138 = vector.extract_strided_slice %54 {offsets = [0, 112], sizes = [32, 16], strides = [1, 1]} : vector<32x192xbf16> to vector<32x16xbf16>
    %139 = vector.shape_cast %138 : vector<32x16xbf16> to vector<2x16x16xbf16>
    %140 = vector.extract_strided_slice %54 {offsets = [0, 176], sizes = [32, 16], strides = [1, 1]} : vector<32x192xbf16> to vector<32x16xbf16>
    %141 = vector.shape_cast %140 : vector<32x16xbf16> to vector<2x16x16xbf16>
    "tpu.trace_start"() <{level = 10 : i32, message = "bqd,bkd->bqk"}> : () -> ()
    %cst_61 = arith.constant dense<0.000000e+00> : vector<2x16x16xf32>
    %142 = tpu.matmul %137, %139, %cst_61 {dimension_numbers = #tpu.dot_dimension_numbers<[2], [2], [1], [1], [0, 0, 0, 1, 1, 1], [0], [0]>} : vector<2x16x16xbf16>, vector<2x16x16xbf16>, vector<2x16x16xf32> -> vector<2x16x16xf32>
    "tpu.trace_stop"() : () -> ()
    %143 = vector.shape_cast %60 : vector<16x16xf32> to vector<1x16x16xf32>
    %144 = vector.broadcast %143 : vector<1x16x16xf32> to vector<2x16x16xf32>
    %145 = arith.addf %142, %144 : vector<2x16x16xf32>
    %cst_62 = arith.constant dense<0xFF800000> : vector<2x16xf32>
    %146 = vector.multi_reduction <maximumf>, %145, %cst_62 [2] : vector<2x16x16xf32> to vector<2x16xf32>
    %147 = vector.shape_cast %146 : vector<2x16xf32> to vector<2x16x1xf32>
    %148 = vector.broadcast %147 : vector<2x16x1xf32> to vector<2x16x16xf32>
    %149 = arith.subf %145, %148 : vector<2x16x16xf32>
    %150 = math.exp %149 : vector<2x16x16xf32>
    %cst_63 = arith.constant dense<0.000000e+00> : vector<2x16xf32>
    %151 = vector.multi_reduction <add>, %150, %cst_63 [2] : vector<2x16x16xf32> to vector<2x16xf32>
    %152 = vector.shape_cast %151 : vector<2x16xf32> to vector<2x16x1xf32>
    %153 = tpu.reciprocal %152 {approx = true} : vector<2x16x1xf32> -> vector<2x16x1xf32>
    %154 = vector.broadcast %153 : vector<2x16x1xf32> to vector<2x16x16xf32>
    %155 = arith.mulf %150, %154 : vector<2x16x16xf32>
    %156 = arith.truncf %155 : vector<2x16x16xf32> to vector<2x16x16xbf16>
    "tpu.trace_start"() <{level = 10 : i32, message = "bqk,bkd->bqd"}> : () -> ()
    %cst_64 = arith.constant dense<0.000000e+00> : vector<2x16x16xf32>
    %157 = tpu.matmul %156, %141, %cst_64 {dimension_numbers = #tpu.dot_dimension_numbers<[2], [1], [1], [2], [0, 0, 0, 1, 1, 2], [0], [0]>} : vector<2x16x16xbf16>, vector<2x16x16xbf16>, vector<2x16x16xf32> -> vector<2x16x16xf32>
    "tpu.trace_stop"() : () -> ()
    %158 = vector.shape_cast %157 : vector<2x16x16xf32> to vector<32x16xf32>
    %159 = arith.truncf %158 : vector<32x16xf32> to vector<32x16xbf16>
    %c0_65 = arith.constant 0 : index
    %c48 = arith.constant 48 : index
    %160 = vector.load %arg17[%c0_65, %c48] : memref<32x64xbf16, #tpu.memory_space<vmem>>, vector<32x16xbf16>
    tpu.vector_store %arg17[%c0_65, %c48], %159 {strides = array<i32>} : memref<32x64xbf16, #tpu.memory_space<vmem>>, vector<32x16xbf16>,
    %c0_66 = arith.constant 0 : index
    %c0_67 = arith.constant 0 : index
    %161 = vector.load %arg17[%c0_66, %c0_67] : memref<32x64xbf16, #tpu.memory_space<vmem>>, vector<32x64xbf16>
    %cst_68 = arith.constant dense<0.000000e+00> : vector<32x64xf32>
    %162 = tpu.matmul %161, %17, %cst_68 {dimension_numbers = #tpu.dot_dimension_numbers<[1], [0], [0], [1], [0, 0, 1, 1], [], []>} : vector<32x64xbf16>, vector<64x64xbf16>, vector<32x64xf32> -> vector<32x64xf32>
    %163 = vector.broadcast %19 : vector<1x64xf32> to vector<32x64xf32>
    %164 = arith.addf %162, %163 : vector<32x64xf32>
    %165 = arith.addf %3, %164 : vector<32x64xf32>
    %cst_69 = arith.constant dense<0.000000e+00> : vector<32xf32>
    %166 = vector.multi_reduction <add>, %165, %cst_69 [1] : vector<32x64xf32> to vector<32xf32>
    %167 = vector.shape_cast %166 : vector<32xf32> to vector<32x1xf32>
    %cst_70 = arith.constant 6.400000e+01 : f32
    %168 = vector.broadcast %cst_70 : f32 to vector<32x1xf32>
    %169 = arith.divf %167, %168 : vector<32x1xf32>
    %170 = vector.broadcast %169 : vector<32x1xf32> to vector<32x64xf32>
    %171 = arith.subf %165, %170 : vector<32x64xf32>
    %172 = arith.mulf %171, %171 : vector<32x64xf32>
    %cst_71 = arith.constant dense<0.000000e+00> : vector<32xf32>
    %173 = vector.multi_reduction <add>, %172, %cst_71 [1] : vector<32x64xf32> to vector<32xf32>
    %174 = vector.shape_cast %173 : vector<32xf32> to vector<32x1xf32>
    %cst_72 = arith.constant 6.400000e+01 : f32
    %175 = vector.broadcast %cst_72 : f32 to vector<32x1xf32>
    %176 = arith.divf %174, %175 : vector<32x1xf32>
    %177 = vector.broadcast %169 : vector<32x1xf32> to vector<32x64xf32>
    %178 = arith.subf %165, %177 : vector<32x64xf32>
    %cst_73 = arith.constant 9.99999974E-6 : f32
    %179 = vector.broadcast %cst_73 : f32 to vector<32x1xf32>
    %180 = arith.addf %176, %179 : vector<32x1xf32>
    %181 = math.rsqrt %180 : vector<32x1xf32>
    %182 = vector.broadcast %181 : vector<32x1xf32> to vector<32x64xf32>
    %183 = arith.mulf %178, %182 : vector<32x64xf32>
    %184 = vector.broadcast %9 : vector<1x64xf32> to vector<32x64xf32>
    %185 = arith.mulf %183, %184 : vector<32x64xf32>
    %186 = vector.broadcast %11 : vector<1x64xf32> to vector<32x64xf32>
    %187 = arith.addf %185, %186 : vector<32x64xf32>
    %188 = arith.truncf %187 : vector<32x64xf32> to vector<32x64xbf16>
    %cst_74 = arith.constant dense<0.000000e+00> : vector<32x256xf32>
    %189 = tpu.matmul %188, %21, %cst_74 {dimension_numbers = #tpu.dot_dimension_numbers<[1], [0], [0], [1], [0, 0, 1, 1], [], []>} : vector<32x64xbf16>, vector<64x256xbf16>, vector<32x256xf32> -> vector<32x256xf32>
    %190 = vector.broadcast %23 : vector<1x256xf32> to vector<32x256xf32>
    %191 = arith.addf %189, %190 : vector<32x256xf32>
    %cst_75 = arith.constant 5.000000e-01 : f32
    %192 = vector.broadcast %cst_75 : f32 to vector<32x256xf32>
    %193 = arith.mulf %192, %191 : vector<32x256xf32>
    %cst_76 = arith.constant 4.471500e-02 : f32
    %194 = vector.broadcast %cst_76 : f32 to vector<32x256xf32>
    %195 = arith.mulf %194, %191 : vector<32x256xf32>
    %196 = arith.mulf %195, %191 : vector<32x256xf32>
    %197 = arith.mulf %196, %191 : vector<32x256xf32>
    %198 = arith.addf %191, %197 : vector<32x256xf32>
    %cst_77 = arith.constant 0.797884583 : f32
    %199 = vector.broadcast %cst_77 : f32 to vector<32x256xf32>
    %200 = arith.mulf %199, %198 : vector<32x256xf32>
    %201 = math.tanh %200 : vector<32x256xf32>
    %cst_78 = arith.constant 1.000000e+00 : f32
    %202 = vector.broadcast %cst_78 : f32 to vector<32x256xf32>
    %203 = arith.addf %202, %201 : vector<32x256xf32>
    %204 = arith.mulf %193, %203 : vector<32x256xf32>
    %205 = arith.truncf %204 : vector<32x256xf32> to vector<32x256xbf16>
    %cst_79 = arith.constant dense<0.000000e+00> : vector<32x64xf32>
    %206 = tpu.matmul %205, %25, %cst_79 {dimension_numbers = #tpu.dot_dimension_numbers<[1], [0], [0], [1], [0, 0, 1, 1], [], []>} : vector<32x256xbf16>, vector<256x64xbf16>, vector<32x64xf32> -> vector<32x64xf32>
    %207 = vector.broadcast %27 : vector<1x64xf32> to vector<32x64xf32>
    %208 = arith.addf %206, %207 : vector<32x64xf32>
    %209 = arith.addf %165, %208 : vector<32x64xf32>
    %c1_i32 = arith.constant 1 : i32
    %210 = arith.cmpi slt, %arg0, %c1_i32 : i32
    %211 = arith.extui %210 : i1 to i32
    %c0_i32_80 = arith.constant 0 : i32
    %212 = arith.cmpi ne, %211, %c0_i32_80 : i32
    scf.if %212 {
      %c0_83 = arith.constant 0 : index
      %c0_84 = arith.constant 0 : index
      %216 = vector.load %arg16[%c0_83, %c0_84] : memref<32x64xf32, #tpu.memory_space<vmem>>, vector<32x64xf32>
      tpu.vector_store %arg16[%c0_83, %c0_84], %209 {strides = array<i32>} : memref<32x64xf32, #tpu.memory_space<vmem>>, vector<32x64xf32>,
    } else {
    }
    %c1_i32_81 = arith.constant 1 : i32
    %213 = arith.cmpi eq, %arg0, %c1_i32_81 : i32
    %214 = arith.extui %213 : i1 to i32
    %c0_i32_82 = arith.constant 0 : i32
    %215 = arith.cmpi ne, %214, %c0_i32_82 : i32
    scf.if %215 {
      %c0_83 = arith.constant 0 : index
      %c0_84 = arith.constant 0 : index
      %216 = vector.load %arg14[%c0_83, %c0_84] : memref<1x64xf32, #tpu.memory_space<vmem>>, vector<1x64xf32>
      %c0_85 = arith.constant 0 : index
      %c0_86 = arith.constant 0 : index
      %217 = vector.load %arg15[%c0_85, %c0_86] : memref<1x64xf32, #tpu.memory_space<vmem>>, vector<1x64xf32>
      %cst_87 = arith.constant dense<0.000000e+00> : vector<32xf32>
      %218 = vector.multi_reduction <add>, %209, %cst_87 [1] : vector<32x64xf32> to vector<32xf32>
      %219 = vector.shape_cast %218 : vector<32xf32> to vector<32x1xf32>
      %cst_88 = arith.constant 6.400000e+01 : f32
      %220 = vector.broadcast %cst_88 : f32 to vector<32x1xf32>
      %221 = arith.divf %219, %220 : vector<32x1xf32>
      %222 = vector.broadcast %221 : vector<32x1xf32> to vector<32x64xf32>
      %223 = arith.subf %209, %222 : vector<32x64xf32>
      %224 = arith.mulf %223, %223 : vector<32x64xf32>
      %cst_89 = arith.constant dense<0.000000e+00> : vector<32xf32>
      %225 = vector.multi_reduction <add>, %224, %cst_89 [1] : vector<32x64xf32> to vector<32xf32>
      %226 = vector.shape_cast %225 : vector<32xf32> to vector<32x1xf32>
      %cst_90 = arith.constant 6.400000e+01 : f32
      %227 = vector.broadcast %cst_90 : f32 to vector<32x1xf32>
      %228 = arith.divf %226, %227 : vector<32x1xf32>
      %229 = vector.broadcast %221 : vector<32x1xf32> to vector<32x64xf32>
      %230 = arith.subf %209, %229 : vector<32x64xf32>
      %cst_91 = arith.constant 9.99999974E-6 : f32
      %231 = vector.broadcast %cst_91 : f32 to vector<32x1xf32>
      %232 = arith.addf %228, %231 : vector<32x1xf32>
      %233 = math.rsqrt %232 : vector<32x1xf32>
      %234 = vector.broadcast %233 : vector<32x1xf32> to vector<32x64xf32>
      %235 = arith.mulf %230, %234 : vector<32x64xf32>
      %236 = vector.broadcast %216 : vector<1x64xf32> to vector<32x64xf32>
      %237 = arith.mulf %235, %236 : vector<32x64xf32>
      %238 = vector.broadcast %217 : vector<1x64xf32> to vector<32x64xf32>
      %239 = arith.addf %237, %238 : vector<32x64xf32>
      %c0_92 = arith.constant 0 : index
      %c0_93 = arith.constant 0 : index
      %240 = vector.load %arg16[%c0_92, %c0_93] : memref<32x64xf32, #tpu.memory_space<vmem>>, vector<32x64xf32>
      tpu.vector_store %arg16[%c0_92, %c0_93], %239 {strides = array<i32>} : memref<32x64xf32, #tpu.memory_space<vmem>>, vector<32x64xf32>,
    } else {
    }
    return
  }
  func.func @transform_1(%arg0: i32) -> (i32, i32, i32) {
    %c0_i32 = arith.constant 0 : i32
    %c0_i32_0 = arith.constant 0 : i32
    %c0_i32_1 = arith.constant 0 : i32
    return %arg0, %c0_i32, %c0_i32_0 : i32, i32, i32
  }
  func.func @transform_2(%arg0: i32) -> (i32, i32, i32) {
    %c0_i32 = arith.constant 0 : i32
    %c0_i32_0 = arith.constant 0 : i32
    %c0_i32_1 = arith.constant 0 : i32
    return %arg0, %c0_i32, %c0_i32_0 : i32, i32, i32
  }
  func.func @transform_3(%arg0: i32) -> (i32, i32, i32) {
    %c0_i32 = arith.constant 0 : i32
    %c0_i32_0 = arith.constant 0 : i32
    %c0_i32_1 = arith.constant 0 : i32
    return %arg0, %c0_i32, %c0_i32_0 : i32, i32, i32
  }
  func.func @transform_4(%arg0: i32) -> (i32, i32, i32) {
    %c0_i32 = arith.constant 0 : i32
    %c0_i32_0 = arith.constant 0 : i32
    %c0_i32_1 = arith.constant 0 : i32
    return %arg0, %c0_i32, %c0_i32_0 : i32, i32, i32
  }
  func.func @transform_5(%arg0: i32) -> (i32, i32, i32) {
    %c0_i32 = arith.constant 0 : i32
    %c0_i32_0 = arith.constant 0 : i32
    %c0_i32_1 = arith.constant 0 : i32
    return %arg0, %c0_i32, %c0_i32_0 : i32, i32, i32
  }
  func.func @transform_6(%arg0: i32) -> (i32, i32, i32) {
    %c0_i32 = arith.constant 0 : i32
    %c0_i32_0 = arith.constant 0 : i32
    %c0_i32_1 = arith.constant 0 : i32
    return %arg0, %c0_i32, %c0_i32_0 : i32, i32, i32
  }
  func.func @transform_7(%arg0: i32) -> (i32, i32, i32) {
    %c0_i32 = arith.constant 0 : i32
    %c0_i32_0 = arith.constant 0 : i32
    %c0_i32_1 = arith.constant 0 : i32
    return %arg0, %c0_i32, %c0_i32_0 : i32, i32, i32
  }
  func.func @transform_8(%arg0: i32) -> (i32, i32, i32) {
    %c0_i32 = arith.constant 0 : i32
    %c0_i32_0 = arith.constant 0 : i32
    %c0_i32_1 = arith.constant 0 : i32
    return %arg0, %c0_i32, %c0_i32_0 : i32, i32, i32
  }
  func.func @transform_9(%arg0: i32) -> (i32, i32, i32) {
    %c0_i32 = arith.constant 0 : i32
    %c0_i32_0 = arith.constant 0 : i32
    %c0_i32_1 = arith.constant 0 : i32
    return %arg0, %c0_i32, %c0_i32_0 : i32, i32, i32
  }
  func.func @transform_10(%arg0: i32) -> (i32, i32, i32) {
    %c0_i32 = arith.constant 0 : i32
    %c0_i32_0 = arith.constant 0 : i32
    %c0_i32_1 = arith.constant 0 : i32
    return %arg0, %c0_i32, %c0_i32_0 : i32, i32, i32
  }
  func.func @transform_11(%arg0: i32) -> (i32, i32, i32) {
    %c0_i32 = arith.constant 0 : i32
    %c0_i32_0 = arith.constant 0 : i32
    %c0_i32_1 = arith.constant 0 : i32
    return %arg0, %c0_i32, %c0_i32_0 : i32, i32, i32
  }
  func.func @transform_12(%arg0: i32) -> (i32, i32, i32) {
    %c0_i32 = arith.constant 0 : i32
    %c0_i32_0 = arith.constant 0 : i32
    %c0_i32_1 = arith.constant 0 : i32
    return %arg0, %c0_i32, %c0_i32_0 : i32, i32, i32
  }
  func.func @transform_13(%arg0: i32) -> (i32, i32) {
    %c0_i32 = arith.constant 0 : i32
    %c0_i32_0 = arith.constant 0 : i32
    %c0_i32_1 = arith.constant 0 : i32
    return %c0_i32, %c0_i32_0 : i32, i32
  }
  func.func @transform_14(%arg0: i32) -> (i32, i32) {
    %c0_i32 = arith.constant 0 : i32
    %c0_i32_0 = arith.constant 0 : i32
    %c0_i32_1 = arith.constant 0 : i32
    return %c0_i32, %c0_i32_0 : i32, i32
  }
  func.func @transform_15(%arg0: i32) -> (i32, i32) {
    %c0_i32 = arith.constant 0 : i32
    %c0_i32_0 = arith.constant 0 : i32
    %c0_i32_1 = arith.constant 0 : i32
    return %c0_i32, %c0_i32_0 : i32, i32
  }
}

</mosaic_0001>

<llo_original>
// kernel: tpu_custom_call.1
$region0: #{tpu_custom_call.1}
  #allocation0 [shape = 'u32[]', space=smem, size = 0x4, offset = 0x4, fixed_abs, tag = 'smem constant byte address 0x4 - core index']
  #allocation1 [shape = 'u32[72,128]{1,0:T(1,128)}', space=vmem, size = 0x9000, scoped, tag = 'internal scratch']
  #allocation2 [shape = 'bf16[32,64]{1,0:T(8,128)(2,1)}', space=vmem, size = 0x2000, scoped, tag = 'scratch operand']
  #allocation3 [shape = 's32[1]{0}', space=sflag, size = 0x4, scoped, tag = 'scratch operand']
  #allocation6 [shape = 's32[]', space=sflag, size = 0x4, offset = 0, fixed_abs, tag = 'sflag constant byte address 0x0 - dummy sync flag']
  %s0 = inlined_call_operand.vmem [shape: f32[32,64], index: 0, kind: input, shape index: {}]
  %s1 = inlined_call_operand.vmem [shape: f32[2,1,64], index: 1, kind: input, shape index: {}]
  %s2 = inlined_call_operand.vmem [shape: f32[2,1,64], index: 2, kind: input, shape index: {}]
  %s3 = inlined_call_operand.vmem [shape: bf16[2,64,192], index: 3, kind: input, shape index: {}]
  %s4 = inlined_call_operand.vmem [shape: f32[2,1,192], index: 4, kind: input, shape index: {}]
  %s5 = inlined_call_operand.vmem [shape: bf16[2,64,64], index: 5, kind: input, shape index: {}]
  %s6 = inlined_call_operand.vmem [shape: f32[2,1,64], index: 6, kind: input, shape index: {}]
  %s7 = inlined_call_operand.vmem [shape: f32[2,1,64], index: 7, kind: input, shape index: {}]
  %s8 = inlined_call_operand.vmem [shape: f32[2,1,64], index: 8, kind: input, shape index: {}]
  %s9 = inlined_call_operand.vmem [shape: bf16[2,64,256], index: 9, kind: input, shape index: {}]
  %s10 = inlined_call_operand.vmem [shape: f32[2,1,256], index: 10, kind: input, shape index: {}]
  %s11 = inlined_call_operand.vmem [shape: bf16[2,256,64], index: 11, kind: input, shape index: {}]
  %s12 = inlined_call_operand.vmem [shape: f32[2,1,64], index: 12, kind: input, shape index: {}]
  %s13 = inlined_call_operand.vmem [shape: f32[1,64], index: 13, kind: input, shape index: {}]
  %s14 = inlined_call_operand.vmem [shape: f32[1,64], index: 14, kind: input, shape index: {}]
  %s15 = inlined_call_operand.hbm [shape: f32[32,64], index: 15, kind: output, shape index: {}]
  %s16 = sld [smem:[#allocation0]]
  $region120: #{tpu_custom_call.1} parent=0
    _
  %s18 = ssub.s32 1, %s16
  %s19 = scalar_select 0, %s18, %s16
  $region1: #{tpu_custom_call.1} parent=0
    #allocation4 [shape = 'u8[16384]{0}', space=vmem, size = 0x4000, scoped, tag = 'output window, operand 0, single buffered']
    #allocation5 [shape = 's32[2]{0}', space=sflag, size = 0x8, scoped, tag = 'scoped memory for tpu_custom_call.1']
    %20 = vsyncpa [#allocation5], 0
    loop: start=0, step=1, limit=4
    $region2: #{tpu_custom_call.1} parent=1 // loop_pre_header
      _
    $region3: #{tpu_custom_call.1} parent=1 // loop_header
      %s22 = sphi 0, %s26
      %p23 = scmp.ge.s32.totalorder %s22, 4
      %s32 = sphi 0, %s34
      %s35 = sphi 0, %s32
      %s36 = sphi 0, %s35
      %s52 = sphi 0, %s36
      %s58 = sphi 0, %s60
      %s61 = sphi 0, %s58
      %s62 = sphi 0, %s61
      %s78 = sphi 0, %s62
      %s84 = sphi 0, %s86
      %s87 = sphi 0, %s84
      %s88 = sphi 0, %s87
      %s104 = sphi 0, %s88
      %s110 = sphi 0, %s112
      %s113 = sphi 0, %s110
      %s114 = sphi 0, %s113
      %s130 = sphi 0, %s114
      %s136 = sphi 0, %s138
      %s139 = sphi 0, %s136
      %s140 = sphi 0, %s139
      %s156 = sphi 0, %s140
      %s162 = sphi 0, %s164
      %s165 = sphi 0, %s162
      %s166 = sphi 0, %s165
      %s182 = sphi 0, %s166
      %s188 = sphi 0, %s190
      %s191 = sphi 0, %s188
      %s192 = sphi 0, %s191
      %s208 = sphi 0, %s192
      %s214 = sphi 0, %s216
      %s217 = sphi 0, %s214
      %s218 = sphi 0, %s217
      %s234 = sphi 0, %s218
      %s240 = sphi 0, %s242
      %s243 = sphi 0, %s240
      %s244 = sphi 0, %s243
      %s260 = sphi 0, %s244
      %s266 = sphi 0, %s268
      %s269 = sphi 0, %s266
      %s270 = sphi 0, %s269
      %s286 = sphi 0, %s270
      %s292 = sphi 0, %s294
      %s295 = sphi 0, %s292
      %s296 = sphi 0, %s295
      %s312 = sphi 0, %s296
      %s318 = sphi 0, %s320
      %s321 = sphi 0, %s318
      %s322 = sphi 0, %s321
      %s338 = sphi 0, %s322
      %s342 = sphi 0, %s342
      %s344 = sphi 0, %s342
      %s345 = sphi 0, %s344
      %s359 = sphi 0, %s345
      %s363 = sphi 0, %s363
      %s365 = sphi 0, %s363
      %s366 = sphi 0, %s365
      %s380 = sphi 0, %s366
      %s384 = sphi 0, %s384
      %s386 = sphi 0, %s384
      %s387 = sphi 0, %s386
      %s401 = sphi 0, %s387
    $region4: #{tpu_custom_call.1} parent=1 // loop_header_branch
      %25 = sbr.rel (%p23) target = $region8
    $region5: #{tpu_custom_call.1} parent=1 // loop_body
      %s27 = ssub.s32 %s22, 1
      %s28 = ssub.s32 %s22, 2
      %s29 = sadd.s32 %s22, 1
      %s30 = ssub.s32 %s22, %s29
      %p31 = scmp.eq.s32.totalorder %s30, 0
      %s33 = sadd.s32 %s32, 1
      %s34 = scalar_select %p31, %s32, %s33
      %p37 = pneg %p31
      %p38 = scmp.eq.s32.totalorder %s22, 1
      %p39 = por %p37, %p38
      %p40 = scmp.ne.s32.totalorder %s32, %s35
      %p41 = scmp.eq.s32.totalorder %s22, 0
      %p42 = por %p40, %p41
      %p43 = scmp.ne.s32.totalorder %s32, %s35
      %p44 = scmp.eq.s32.totalorder %s27, 1
      %p45 = por %p43, %p44
      %p46 = scmp.ne.s32.totalorder %s35, %s36
      %p47 = scmp.eq.s32.totalorder %s27, 0
      %p48 = por %p46, %p47
      %p49 = scmp.ne.s32.totalorder %s35, %s36
      %p50 = scmp.eq.s32.totalorder %s28, 1
      %p51 = por %p49, %p50
      %p53 = scmp.ne.s32.totalorder %s36, %s52
      %p54 = scmp.eq.s32.totalorder %s28, 0
      %p55 = por %p53, %p54
      %s56 = ssub.s32 %s22, %s29
      %p57 = scmp.eq.s32.totalorder %s56, 0
      %s59 = sadd.s32 %s58, 1
      %s60 = scalar_select %p57, %s58, %s59
      %p63 = pneg %p57
      %p64 = scmp.eq.s32.totalorder %s22, 1
      %p65 = por %p63, %p64
      %p66 = scmp.ne.s32.totalorder %s58, %s61
      %p67 = scmp.eq.s32.totalorder %s22, 0
      %p68 = por %p66, %p67
      %p69 = scmp.ne.s32.totalorder %s58, %s61
      %p70 = scmp.eq.s32.totalorder %s27, 1
      %p71 = por %p69, %p70
      %p72 = scmp.ne.s32.totalorder %s61, %s62
      %p73 = scmp.eq.s32.totalorder %s27, 0
      %p74 = por %p72, %p73
      %p75 = scmp.ne.s32.totalorder %s61, %s62
      %p76 = scmp.eq.s32.totalorder %s28, 1
      %p77 = por %p75, %p76
      %p79 = scmp.ne.s32.totalorder %s62, %s78
      %p80 = scmp.eq.s32.totalorder %s28, 0
      %p81 = por %p79, %p80
      %s82 = ssub.s32 %s22, %s29
      %p83 = scmp.eq.s32.totalorder %s82, 0
      %s85 = sadd.s32 %s84, 1
      %s86 = scalar_select %p83, %s84, %s85
      %p89 = pneg %p83
      %p90 = scmp.eq.s32.totalorder %s22, 1
      %p91 = por %p89, %p90
      %p92 = scmp.ne.s32.totalorder %s84, %s87
      %p93 = scmp.eq.s32.totalorder %s22, 0
      %p94 = por %p92, %p93
      %p95 = scmp.ne.s32.totalorder %s84, %s87
      %p96 = scmp.eq.s32.totalorder %s27, 1
      %p97 = por %p95, %p96
      %p98 = scmp.ne.s32.totalorder %s87, %s88
      %p99 = scmp.eq.s32.totalorder %s27, 0
      %p100 = por %p98, %p99
      %p101 = scmp.ne.s32.totalorder %s87, %s88
      %p102 = scmp.eq.s32.totalorder %s28, 1
      %p103 = por %p101, %p102
      %p105 = scmp.ne.s32.totalorder %s88, %s104
      %p106 = scmp.eq.s32.totalorder %s28, 0
      %p107 = por %p105, %p106
      %s108 = ssub.s32 %s22, %s29
      %p109 = scmp.eq.s32.totalorder %s108, 0
      %s111 = sadd.s32 %s110, 1
      %s112 = scalar_select %p109, %s110, %s111
      %p115 = pneg %p109
      %p116 = scmp.eq.s32.totalorder %s22, 1
      %p117 = por %p115, %p116
      %p118 = scmp.ne.s32.totalorder %s110, %s113
      %p119 = scmp.eq.s32.totalorder %s22, 0
      %p120 = por %p118, %p119
      %p121 = scmp.ne.s32.totalorder %s110, %s113
      %p122 = scmp.eq.s32.totalorder %s27, 1
      %p123 = por %p121, %p122
      %p124 = scmp.ne.s32.totalorder %s113, %s114
      %p125 = scmp.eq.s32.totalorder %s27, 0
      %p126 = por %p124, %p125
      %p127 = scmp.ne.s32.totalorder %s113, %s114
      %p128 = scmp.eq.s32.totalorder %s28, 1
      %p129 = por %p127, %p128
      %p131 = scmp.ne.s32.totalorder %s114, %s130
      %p132 = scmp.eq.s32.totalorder %s28, 0
      %p133 = por %p131, %p132
      %s134 = ssub.s32 %s22, %s29
      %p135 = scmp.eq.s32.totalorder %s134, 0
      %s137 = sadd.s32 %s136, 1
      %s138 = scalar_select %p135, %s136, %s137
      %p141 = pneg %p135
      %p142 = scmp.eq.s32.totalorder %s22, 1
      %p143 = por %p141, %p142
      %p144 = scmp.ne.s32.totalorder %s136, %s139
      %p145 = scmp.eq.s32.totalorder %s22, 0
      %p146 = por %p144, %p145
      %p147 = scmp.ne.s32.totalorder %s136, %s139
      %p148 = scmp.eq.s32.totalorder %s27, 1
      %p149 = por %p147, %p148
      %p150 = scmp.ne.s32.totalorder %s139, %s140
      %p151 = scmp.eq.s32.totalorder %s27, 0
      %p152 = por %p150, %p151
      %p153 = scmp.ne.s32.totalorder %s139, %s140
      %p154 = scmp.eq.s32.totalorder %s28, 1
      %p155 = por %p153, %p154
      %p157 = scmp.ne.s32.totalorder %s140, %s156
      %p158 = scmp.eq.s32.totalorder %s28, 0
      %p159 = por %p157, %p158
      %s160 = ssub.s32 %s22, %s29
      %p161 = scmp.eq.s32.totalorder %s160, 0
      %s163 = sadd.s32 %s162, 1
      %s164 = scalar_select %p161, %s162, %s163
      %p167 = pneg %p161
      %p168 = scmp.eq.s32.totalorder %s22, 1
      %p169 = por %p167, %p168
      %p170 = scmp.ne.s32.totalorder %s162, %s165
      %p171 = scmp.eq.s32.totalorder %s22, 0
      %p172 = por %p170, %p171
      %p173 = scmp.ne.s32.totalorder %s162, %s165
      %p174 = scmp.eq.s32.totalorder %s27, 1
      %p175 = por %p173, %p174
      %p176 = scmp.ne.s32.totalorder %s165, %s166
      %p177 = scmp.eq.s32.totalorder %s27, 0
      %p178 = por %p176, %p177
      %p179 = scmp.ne.s32.totalorder %s165, %s166
      %p180 = scmp.eq.s32.totalorder %s28, 1
      %p181 = por %p179, %p180
      %p183 = scmp.ne.s32.totalorder %s166, %s182
      %p184 = scmp.eq.s32.totalorder %s28, 0
      %p185 = por %p183, %p184
      %s186 = ssub.s32 %s22, %s29
      %p187 = scmp.eq.s32.totalorder %s186, 0
      %s189 = sadd.s32 %s188, 1
      %s190 = scalar_select %p187, %s188, %s189
      %p193 = pneg %p187
      %p194 = scmp.eq.s32.totalorder %s22, 1
      %p195 = por %p193, %p194
      %p196 = scmp.ne.s32.totalorder %s188, %s191
      %p197 = scmp.eq.s32.totalorder %s22, 0
      %p198 = por %p196, %p197
      %p199 = scmp.ne.s32.totalorder %s188, %s191
      %p200 = scmp.eq.s32.totalorder %s27, 1
      %p201 = por %p199, %p200
      %p202 = scmp.ne.s32.totalorder %s191, %s192
      %p203 = scmp.eq.s32.totalorder %s27, 0
      %p204 = por %p202, %p203
      %p205 = scmp.ne.s32.totalorder %s191, %s192
      %p206 = scmp.eq.s32.totalorder %s28, 1
      %p207 = por %p205, %p206
      %p209 = scmp.ne.s32.totalorder %s192, %s208
      %p210 = scmp.eq.s32.totalorder %s28, 0
      %p211 = por %p209, %p210
      %s212 = ssub.s32 %s22, %s29
      %p213 = scmp.eq.s32.totalorder %s212, 0
      %s215 = sadd.s32 %s214, 1
      %s216 = scalar_select %p213, %s214, %s215
      %p219 = pneg %p213
      %p220 = scmp.eq.s32.totalorder %s22, 1
      %p221 = por %p219, %p220
      %p222 = scmp.ne.s32.totalorder %s214, %s217
      %p223 = scmp.eq.s32.totalorder %s22, 0
      %p224 = por %p222, %p223
      %p225 = scmp.ne.s32.totalorder %s214, %s217
      %p226 = scmp.eq.s32.totalorder %s27, 1
      %p227 = por %p225, %p226
      %p228 = scmp.ne.s32.totalorder %s217, %s218
      %p229 = scmp.eq.s32.totalorder %s27, 0
      %p230 = por %p228, %p229
      %p231 = scmp.ne.s32.totalorder %s217, %s218
      %p232 = scmp.eq.s32.totalorder %s28, 1
      %p233 = por %p231, %p232
      %p235 = scmp.ne.s32.totalorder %s218, %s234
      %p236 = scmp.eq.s32.totalorder %s28, 0
      %p237 = por %p235, %p236
      %s238 = ssub.s32 %s22, %s29
      %p239 = scmp.eq.s32.totalorder %s238, 0
      %s241 = sadd.s32 %s240, 1
      %s242 = scalar_select %p239, %s240, %s241
      %p245 = pneg %p239
      %p246 = scmp.eq.s32.totalorder %s22, 1
      %p247 = por %p245, %p246
      %p248 = scmp.ne.s32.totalorder %s240, %s243
      %p249 = scmp.eq.s32.totalorder %s22, 0
      %p250 = por %p248, %p249
      %p251 = scmp.ne.s32.totalorder %s240, %s243
      %p252 = scmp.eq.s32.totalorder %s27, 1
      %p253 = por %p251, %p252
      %p254 = scmp.ne.s32.totalorder %s243, %s244
      %p255 = scmp.eq.s32.totalorder %s27, 0
      %p256 = por %p254, %p255
      %p257 = scmp.ne.s32.totalorder %s243, %s244
      %p258 = scmp.eq.s32.totalorder %s28, 1
      %p259 = por %p257, %p258
      %p261 = scmp.ne.s32.totalorder %s244, %s260
      %p262 = scmp.eq.s32.totalorder %s28, 0
      %p263 = por %p261, %p262
      %s264 = ssub.s32 %s22, %s29
      %p265 = scmp.eq.s32.totalorder %s264, 0
      %s267 = sadd.s32 %s266, 1
      %s268 = scalar_select %p265, %s266, %s267
      %p271 = pneg %p265
      %p272 = scmp.eq.s32.totalorder %s22, 1
      %p273 = por %p271, %p272
      %p274 = scmp.ne.s32.totalorder %s266, %s269
      %p275 = scmp.eq.s32.totalorder %s22, 0
      %p276 = por %p274, %p275
      %p277 = scmp.ne.s32.totalorder %s266, %s269
      %p278 = scmp.eq.s32.totalorder %s27, 1
      %p279 = por %p277, %p278
      %p280 = scmp.ne.s32.totalorder %s269, %s270
      %p281 = scmp.eq.s32.totalorder %s27, 0
      %p282 = por %p280, %p281
      %p283 = scmp.ne.s32.totalorder %s269, %s270
      %p284 = scmp.eq.s32.totalorder %s28, 1
      %p285 = por %p283, %p284
      %p287 = scmp.ne.s32.totalorder %s270, %s286
      %p288 = scmp.eq.s32.totalorder %s28, 0
      %p289 = por %p287, %p288
      %s290 = ssub.s32 %s22, %s29
      %p291 = scmp.eq.s32.totalorder %s290, 0
      %s293 = sadd.s32 %s292, 1
      %s294 = scalar_select %p291, %s292, %s293
      %p297 = pneg %p291
      %p298 = scmp.eq.s32.totalorder %s22, 1
      %p299 = por %p297, %p298
      %p300 = scmp.ne.s32.totalorder %s292, %s295
      %p301 = scmp.eq.s32.totalorder %s22, 0
      %p302 = por %p300, %p301
      %p303 = scmp.ne.s32.totalorder %s292, %s295
      %p304 = scmp.eq.s32.totalorder %s27, 1
      %p305 = por %p303, %p304
      %p306 = scmp.ne.s32.totalorder %s295, %s296
      %p307 = scmp.eq.s32.totalorder %s27, 0
      %p308 = por %p306, %p307
      %p309 = scmp.ne.s32.totalorder %s295, %s296
      %p310 = scmp.eq.s32.totalorder %s28, 1
      %p311 = por %p309, %p310
      %p313 = scmp.ne.s32.totalorder %s296, %s312
      %p314 = scmp.eq.s32.totalorder %s28, 0
      %p315 = por %p313, %p314
      %s316 = ssub.s32 %s22, %s29
      %p317 = scmp.eq.s32.totalorder %s316, 0
      %s319 = sadd.s32 %s318, 1
      %s320 = scalar_select %p317, %s318, %s319
      %p323 = pneg %p317
      %p324 = scmp.eq.s32.totalorder %s22, 1
      %p325 = por %p323, %p324
      %p326 = scmp.ne.s32.totalorder %s318, %s321
      %p327 = scmp.eq.s32.totalorder %s22, 0
      %p328 = por %p326, %p327
      %p329 = scmp.ne.s32.totalorder %s318, %s321
      %p330 = scmp.eq.s32.totalorder %s27, 1
      %p331 = por %p329, %p330
      %p332 = scmp.ne.s32.totalorder %s321, %s322
      %p333 = scmp.eq.s32.totalorder %s27, 0
      %p334 = por %p332, %p333
      %p335 = scmp.ne.s32.totalorder %s321, %s322
      %p336 = scmp.eq.s32.totalorder %s28, 1
      %p337 = por %p335, %p336
      %p339 = scmp.ne.s32.totalorder %s322, %s338
      %p340 = scmp.eq.s32.totalorder %s28, 0
      %p341 = por %p339, %p340
      %s343 = sadd.s32 %s342, 1
      %p346 = scmp.eq.s32.totalorder %s22, 1
      %p347 = scmp.ne.s32.totalorder %s342, %s344
      %p348 = scmp.eq.s32.totalorder %s22, 0
      %p349 = por %p347, %p348
      %p350 = scmp.ne.s32.totalorder %s342, %s344
      %p351 = scmp.eq.s32.totalorder %s27, 1
      %p352 = por %p350, %p351
      %p353 = scmp.ne.s32.totalorder %s344, %s345
      %p354 = scmp.eq.s32.totalorder %s27, 0
      %p355 = por %p353, %p354
      %p356 = scmp.ne.s32.totalorder %s344, %s345
      %p357 = scmp.eq.s32.totalorder %s28, 1
      %p358 = por %p356, %p357
      %p360 = scmp.ne.s32.totalorder %s345, %s359
      %p361 = scmp.eq.s32.totalorder %s28, 0
      %p362 = por %p360, %p361
      %s364 = sadd.s32 %s363, 1
      %p367 = scmp.eq.s32.totalorder %s22, 1
      %p368 = scmp.ne.s32.totalorder %s363, %s365
      %p369 = scmp.eq.s32.totalorder %s22, 0
      %p370 = por %p368, %p369
      %p371 = scmp.ne.s32.totalorder %s363, %s365
      %p372 = scmp.eq.s32.totalorder %s27, 1
      %p373 = por %p371, %p372
      %p374 = scmp.ne.s32.totalorder %s365, %s366
      %p375 = scmp.eq.s32.totalorder %s27, 0
      %p376 = por %p374, %p375
      %p377 = scmp.ne.s32.totalorder %s365, %s366
      %p378 = scmp.eq.s32.totalorder %s28, 1
      %p379 = por %p377, %p378
      %p381 = scmp.ne.s32.totalorder %s366, %s380
      %p382 = scmp.eq.s32.totalorder %s28, 0
      %p383 = por %p381, %p382
      %s385 = sadd.s32 %s384, 1
      %p388 = scmp.eq.s32.totalorder %s22, 1
      %p389 = scmp.ne.s32.totalorder %s384, %s386
      %p390 = scmp.eq.s32.totalorder %s22, 0
      %p391 = por %p389, %p390
      %p392 = scmp.ne.s32.totalorder %s384, %s386
      %p393 = scmp.eq.s32.totalorder %s27, 1
      %p394 = por %p392, %p393
      %p395 = scmp.ne.s32.totalorder %s386, %s387
      %p396 = scmp.eq.s32.totalorder %s27, 0
      %p397 = por %p395, %p396
      %p398 = scmp.ne.s32.totalorder %s386, %s387
      %p399 = scmp.eq.s32.totalorder %s28, 1
      %p400 = por %p398, %p399
      %p402 = scmp.ne.s32.totalorder %s387, %s401
      %p403 = scmp.eq.s32.totalorder %s28, 0
      %p404 = por %p402, %p403
      %p405 = scmp.le.s32.totalorder 1, %s22
      %p406 = scmp.lt.s32.totalorder %s22, 3
      %p407 = pnand %p405, %p406
      %p408 = pneg %p407
      // Predicated region
      $region9: #{tpu_custom_call.1} parent=5 // pred_check
        _
      $region10: #{tpu_custom_call.1} parent=5 // pred_check_branch
        %410 = sbr.rel (%p407) target = $region12
      $region11: #{tpu_custom_call.1} parent=5 // pred_region
        %s411 = ssub.s32 %s22, 1
        // Predicated region
        $region13: #{tpu_custom_call.1} parent=11 // pred_check
          %p412 = pneg %p355
        $region14: #{tpu_custom_call.1} parent=11 // pred_check_branch
          %414 = sbr.rel (%p412) target = $region16
        $region15: #{tpu_custom_call.1} parent=11 // pred_region
          _
        $region16: #{tpu_custom_call.1} parent=11 // pred_fallthru
          _
        // Predicated region
        $region17: #{tpu_custom_call.1} parent=11 // pred_check
          %p415 = pneg %p376
        $region18: #{tpu_custom_call.1} parent=11 // pred_check_branch
          %417 = sbr.rel (%p415) target = $region20
        $region19: #{tpu_custom_call.1} parent=11 // pred_region
          _
        $region20: #{tpu_custom_call.1} parent=11 // pred_fallthru
          _
      $region12: #{tpu_custom_call.1} parent=5 // pred_fallthru
        _
      %p418 = scmp.lt.s32.totalorder %s22, 2
      // Predicated region
      $region21: #{tpu_custom_call.1} parent=5 // pred_check
        %p419 = pneg %p418
      $region22: #{tpu_custom_call.1} parent=5 // pred_check_branch
        %421 = sbr.rel (%p419) target = $region24
      $region23: #{tpu_custom_call.1} parent=5 // pred_region
        // Predicated region
        $region25: #{tpu_custom_call.1} parent=23 // pred_check
          %p422 = pneg %p42
        $region26: #{tpu_custom_call.1} parent=23 // pred_check_branch
          %424 = sbr.rel (%p422) target = $region28
        $region27: #{tpu_custom_call.1} parent=23 // pred_region
          %p425 = scmp.lt.s32.totalorder %s22, 1
          %s426 = scalar_select %p425, %s22, 1
          %s427 = scalar_lea.vmem %s1, %s426
        $region28: #{tpu_custom_call.1} parent=23 // pred_fallthru
          _
        // Predicated region
        $region29: #{tpu_custom_call.1} parent=23 // pred_check
          %p428 = pneg %p68
        $region30: #{tpu_custom_call.1} parent=23 // pred_check_branch
          %430 = sbr.rel (%p428) target = $region32
        $region31: #{tpu_custom_call.1} parent=23 // pred_region
          %p431 = scmp.lt.s32.totalorder %s22, 1
          %s432 = scalar_select %p431, %s22, 1
          %s433 = scalar_lea.vmem %s2, %s432
        $region32: #{tpu_custom_call.1} parent=23 // pred_fallthru
          _
        // Predicated region
        $region33: #{tpu_custom_call.1} parent=23 // pred_check
          %p434 = pneg %p94
        $region34: #{tpu_custom_call.1} parent=23 // pred_check_branch
          %436 = sbr.rel (%p434) target = $region36
        $region35: #{tpu_custom_call.1} parent=23 // pred_region
          %p437 = scmp.lt.s32.totalorder %s22, 1
          %s438 = scalar_select %p437, %s22, 1
          %s439 = smul.addr %s438, 16
          %s440 = smul.addr %s439, 4
          %s441 = scalar_lea.vmem %s3, %s440
        $region36: #{tpu_custom_call.1} parent=23 // pred_fallthru
          _
        // Predicated region
        $region37: #{tpu_custom_call.1} parent=23 // pred_check
          %p442 = pneg %p120
        $region38: #{tpu_custom_call.1} parent=23 // pred_check_branch
          %444 = sbr.rel (%p442) target = $region40
        $region39: #{tpu_custom_call.1} parent=23 // pred_region
          %p445 = scmp.lt.s32.totalorder %s22, 1
          %s446 = scalar_select %p445, %s22, 1
          %s447 = smul.addr %s446, 2
          %s448 = scalar_lea.vmem %s4, %s447
        $region40: #{tpu_custom_call.1} parent=23 // pred_fallthru
          _
        // Predicated region
        $region41: #{tpu_custom_call.1} parent=23 // pred_check
          %p449 = pneg %p146
        $region42: #{tpu_custom_call.1} parent=23 // pred_check_branch
          %451 = sbr.rel (%p449) target = $region44
        $region43: #{tpu_custom_call.1} parent=23 // pred_region
          %p452 = scmp.lt.s32.totalorder %s22, 1
          %s453 = scalar_select %p452, %s22, 1
          %s454 = smul.addr %s453, 8
          %s455 = smul.addr %s454, 4
          %s456 = scalar_lea.vmem %s5, %s455
        $region44: #{tpu_custom_call.1} parent=23 // pred_fallthru
          _
        // Predicated region
        $region45: #{tpu_custom_call.1} parent=23 // pred_check
          %p457 = pneg %p172
        $region46: #{tpu_custom_call.1} parent=23 // pred_check_branch
          %459 = sbr.rel (%p457) target = $region48
        $region47: #{tpu_custom_call.1} parent=23 // pred_region
          %p460 = scmp.lt.s32.totalorder %s22, 1
          %s461 = scalar_select %p460, %s22, 1
          %s462 = scalar_lea.vmem %s6, %s461
        $region48: #{tpu_custom_call.1} parent=23 // pred_fallthru
          _
        // Predicated region
        $region49: #{tpu_custom_call.1} parent=23 // pred_check
          %p463 = pneg %p198
        $region50: #{tpu_custom_call.1} parent=23 // pred_check_branch
          %465 = sbr.rel (%p463) target = $region52
        $region51: #{tpu_custom_call.1} parent=23 // pred_region
          %p466 = scmp.lt.s32.totalorder %s22, 1
          %s467 = scalar_select %p466, %s22, 1
          %s468 = scalar_lea.vmem %s7, %s467
        $region52: #{tpu_custom_call.1} parent=23 // pred_fallthru
          _
        // Predicated region
        $region53: #{tpu_custom_call.1} parent=23 // pred_check
          %p469 = pneg %p224
        $region54: #{tpu_custom_call.1} parent=23 // pred_check_branch
          %471 = sbr.rel (%p469) target = $region56
        $region55: #{tpu_custom_call.1} parent=23 // pred_region
          %p472 = scmp.lt.s32.totalorder %s22, 1
          %s473 = scalar_select %p472, %s22, 1
          %s474 = scalar_lea.vmem %s8, %s473
        $region56: #{tpu_custom_call.1} parent=23 // pred_fallthru
          _
        // Predicated region
        $region57: #{tpu_custom_call.1} parent=23 // pred_check
          %p475 = pneg %p250
        $region58: #{tpu_custom_call.1} parent=23 // pred_check_branch
          %477 = sbr.rel (%p475) target = $region60
        $region59: #{tpu_custom_call.1} parent=23 // pred_region
          %p478 = scmp.lt.s32.totalorder %s22, 1
          %s479 = scalar_select %p478, %s22, 1
          %s480 = smul.addr %s479, 16
          %s481 = smul.addr %s480, 4
          %s482 = scalar_lea.vmem %s9, %s481
        $region60: #{tpu_custom_call.1} parent=23 // pred_fallthru
          _
        // Predicated region
        $region61: #{tpu_custom_call.1} parent=23 // pred_check
          %p483 = pneg %p276
        $region62: #{tpu_custom_call.1} parent=23 // pred_check_branch
          %485 = sbr.rel (%p483) target = $region64
        $region63: #{tpu_custom_call.1} parent=23 // pred_region
          %p486 = scmp.lt.s32.totalorder %s22, 1
          %s487 = scalar_select %p486, %s22, 1
          %s488 = smul.addr %s487, 2
          %s489 = scalar_lea.vmem %s10, %s488
        $region64: #{tpu_custom_call.1} parent=23 // pred_fallthru
          _
        // Predicated region
        $region65: #{tpu_custom_call.1} parent=23 // pred_check
          %p490 = pneg %p302
        $region66: #{tpu_custom_call.1} parent=23 // pred_check_branch
          %492 = sbr.rel (%p490) target = $region68
        $region67: #{tpu_custom_call.1} parent=23 // pred_region
          %p493 = scmp.lt.s32.totalorder %s22, 1
          %s494 = scalar_select %p493, %s22, 1
          %s495 = smul.addr %s494, 32
          %s496 = smul.addr %s495, 4
          %s497 = scalar_lea.vmem %s11, %s496
        $region68: #{tpu_custom_call.1} parent=23 // pred_fallthru
          _
        // Predicated region
        $region69: #{tpu_custom_call.1} parent=23 // pred_check
          %p498 = pneg %p328
        $region70: #{tpu_custom_call.1} parent=23 // pred_check_branch
          %500 = sbr.rel (%p498) target = $region72
        $region71: #{tpu_custom_call.1} parent=23 // pred_region
          %p501 = scmp.lt.s32.totalorder %s22, 1
          %s502 = scalar_select %p501, %s22, 1
          %s503 = scalar_lea.vmem %s12, %s502
        $region72: #{tpu_custom_call.1} parent=23 // pred_fallthru
          _
      $region24: #{tpu_custom_call.1} parent=5 // pred_fallthru
        _
      %p504 = scmp.le.s32.totalorder 1, %s22
      %p505 = scmp.lt.s32.totalorder %s22, 3
      %p506 = pnand %p504, %p505
      %p507 = pneg %p506
      // Predicated region
      $region73: #{tpu_custom_call.1} parent=5 // pred_check
        _
      $region74: #{tpu_custom_call.1} parent=5 // pred_check_branch
        %509 = sbr.rel (%p506) target = $region76
      $region75: #{tpu_custom_call.1} parent=5 // pred_region
        %s510 = ssub.s32 %s22, 1
        %p511 = scmp.lt.s32.totalorder %s27, 1
        %s512 = scalar_select %p511, %s27, 1
        %s513 = scalar_lea.vmem %s1, %s512
        %p514 = pneg %p48
        %p515 = pneg %p45
        %p516 = scmp.lt.s32.totalorder %s27, 1
        %s517 = scalar_select %p516, %s27, 1
        %s518 = scalar_lea.vmem %s2, %s517
        %p519 = pneg %p74
        %p520 = pneg %p71
        %p521 = scmp.lt.s32.totalorder %s27, 1
        %s522 = scalar_select %p521, %s27, 1
        %s523 = smul.addr %s522, 16
        %s524 = smul.addr %s523, 4
        %s525 = scalar_lea.vmem %s3, %s524
        %p526 = pneg %p100
        %p527 = pneg %p97
        %p528 = scmp.lt.s32.totalorder %s27, 1
        %s529 = scalar_select %p528, %s27, 1
        %s530 = smul.addr %s529, 2
        %s531 = scalar_lea.vmem %s4, %s530
        %p532 = pneg %p126
        %p533 = pneg %p123
        %p534 = scmp.lt.s32.totalorder %s27, 1
        %s535 = scalar_select %p534, %s27, 1
        %s536 = smul.addr %s535, 8
        %s537 = smul.addr %s536, 4
        %s538 = scalar_lea.vmem %s5, %s537
        %p539 = pneg %p152
        %p540 = pneg %p149
        %p541 = scmp.lt.s32.totalorder %s27, 1
        %s542 = scalar_select %p541, %s27, 1
        %s543 = scalar_lea.vmem %s6, %s542
        %p544 = pneg %p178
        %p545 = pneg %p175
        %p546 = scmp.lt.s32.totalorder %s27, 1
        %s547 = scalar_select %p546, %s27, 1
        %s548 = scalar_lea.vmem %s7, %s547
        %p549 = pneg %p204
        %p550 = pneg %p201
        %p551 = scmp.lt.s32.totalorder %s27, 1
        %s552 = scalar_select %p551, %s27, 1
        %s553 = scalar_lea.vmem %s8, %s552
        %p554 = pneg %p230
        %p555 = pneg %p227
        %p556 = scmp.lt.s32.totalorder %s27, 1
        %s557 = scalar_select %p556, %s27, 1
        %s558 = smul.addr %s557, 16
        %s559 = smul.addr %s558, 4
        %s560 = scalar_lea.vmem %s9, %s559
        %p561 = pneg %p256
        %p562 = pneg %p253
        %p563 = scmp.lt.s32.totalorder %s27, 1
        %s564 = scalar_select %p563, %s27, 1
        %s565 = smul.addr %s564, 2
        %s566 = scalar_lea.vmem %s10, %s565
        %p567 = pneg %p282
        %p568 = pneg %p279
        %p569 = scmp.lt.s32.totalorder %s27, 1
        %s570 = scalar_select %p569, %s27, 1
        %s571 = smul.addr %s570, 32
        %s572 = smul.addr %s571, 4
        %s573 = scalar_lea.vmem %s11, %s572
        %p574 = pneg %p308
        %p575 = pneg %p305
        %p576 = scmp.lt.s32.totalorder %s27, 1
        %s577 = scalar_select %p576, %s27, 1
        %s578 = scalar_lea.vmem %s12, %s577
        %p579 = pneg %p334
        %p580 = pneg %p331
        %p581 = pneg %p355
        %p582 = pneg %p352
        %p583 = pneg %p376
        %p584 = pneg %p373
        %p585 = pneg %p397
        %p586 = pneg %p394
        %p587 = scmp.lt.s32.totalorder %s27, 1
        %s588 = scalar_select %p587, %s27, 1
        %s589 = scalar_lea.vmem %s1, %s588
        %p590 = scmp.lt.s32.totalorder %s27, 1
        %s591 = scalar_select %p590, %s27, 1
        %s592 = scalar_lea.vmem %s2, %s591
        %p593 = scmp.lt.s32.totalorder %s27, 1
        %s594 = scalar_select %p593, %s27, 1
        %s595 = smul.addr %s594, 16
        %s596 = smul.addr %s595, 4
        %s597 = scalar_lea.vmem %s3, %s596
        %p598 = scmp.lt.s32.totalorder %s27, 1
        %s599 = scalar_select %p598, %s27, 1
        %s600 = smul.addr %s599, 2
        %s601 = scalar_lea.vmem %s4, %s600
        %p602 = scmp.lt.s32.totalorder %s27, 1
        %s603 = scalar_select %p602, %s27, 1
        %s604 = smul.addr %s603, 8
        %s605 = smul.addr %s604, 4
        %s606 = scalar_lea.vmem %s5, %s605
        %p607 = scmp.lt.s32.totalorder %s27, 1
        %s608 = scalar_select %p607, %s27, 1
        %s609 = scalar_lea.vmem %s6, %s608
        %p610 = scmp.lt.s32.totalorder %s27, 1
        %s611 = scalar_select %p610, %s27, 1
        %s612 = scalar_lea.vmem %s7, %s611
        %p613 = scmp.lt.s32.totalorder %s27, 1
        %s614 = scalar_select %p613, %s27, 1
        %s615 = scalar_lea.vmem %s8, %s614
        %p616 = scmp.lt.s32.totalorder %s27, 1
        %s617 = scalar_select %p616, %s27, 1
        %s618 = smul.addr %s617, 16
        %s619 = smul.addr %s618, 4
        %s620 = scalar_lea.vmem %s9, %s619
        %p621 = scmp.lt.s32.totalorder %s27, 1
        %s622 = scalar_select %p621, %s27, 1
        %s623 = smul.addr %s622, 2
        %s624 = scalar_lea.vmem %s10, %s623
        %p625 = scmp.lt.s32.totalorder %s27, 1
        %s626 = scalar_select %p625, %s27, 1
        %s627 = smul.addr %s626, 32
        %s628 = smul.addr %s627, 4
        %s629 = scalar_lea.vmem %s11, %s628
        %p630 = scmp.lt.s32.totalorder %s27, 1
        %s631 = scalar_select %p630, %s27, 1
        %s632 = scalar_lea.vmem %s12, %s631
        %p634 = scmp.eq.s32.totalorder %s27, 0
        // Predicated region
        $region77: #{tpu_custom_call.1} parent=75 // pred_check
          %p635 = pneg %p634
        $region78: #{tpu_custom_call.1} parent=75 // pred_check_branch
          %637 = sbr.rel (%p635) target = $region80
        $region79: #{tpu_custom_call.1} parent=75 // pred_region
          // Predicated region
          $region81: #{tpu_custom_call.1} parent=79 // pred_check
            _
          $region82: #{tpu_custom_call.1} parent=79 // pred_check_branch
            %639 = sbr.rel (0) target = $region84
          $region83: #{tpu_custom_call.1} parent=79 // pred_region
            loop: start=0, step=1, limit=1
            $region85: #{tpu_custom_call.1} parent=83 // loop_pre_header
              _
            $region86: #{tpu_custom_call.1} parent=83 // loop_header
              %s641 = sphi 0, %s645
              %p642 = scmp.ge.s32.totalorder %s641, 1
              %s646 = sphi %s0, %s0
              %s647 = sphi [#allocation4], [#allocation4]
            $region87: #{tpu_custom_call.1} parent=83 // loop_header_branch
              %644 = sbr.rel (%p642) target = $region91
            $region88: #{tpu_custom_call.1} parent=83 // loop_body
              %v648 = vld [vmem:[%s646] sm:$0xff]
              %649 = vst [vmem:[%s647] sm:$0xff] %v648
              %v650 = vld [vmem:[%s646 + $0x8] sm:$0xff]
              %651 = vst [vmem:[%s647 + $0x8] sm:$0xff] %v650
              %v652 = vld [vmem:[%s646 + $0x10] sm:$0xff]
              %653 = vst [vmem:[%s647 + $0x10] sm:$0xff] %v652
              %v654 = vld [vmem:[%s646 + $0x18] sm:$0xff]
              %655 = vst [vmem:[%s647 + $0x18] sm:$0xff] %v654
            $region89: #{tpu_custom_call.1} parent=83 // loop_footer
              %s645 = sadd.s32 1, %s641
            $region90: #{tpu_custom_call.1} parent=83 // loop_footer_branch
              %640 = sbr.rel target = $region86
            $region91: #{tpu_custom_call.1} parent=83 // loop_exit
              _
          $region84: #{tpu_custom_call.1} parent=79 // pred_fallthru
            _
          // Predicated region
          $region92: #{tpu_custom_call.1} parent=79 // pred_check
            _
          $region93: #{tpu_custom_call.1} parent=79 // pred_check_branch
            %657 = sbr.rel target = $region95
          $region94: #{tpu_custom_call.1} parent=79 // pred_region
            _
          $region95: #{tpu_custom_call.1} parent=79 // pred_fallthru
            _
          // Predicated region
          $region96: #{tpu_custom_call.1} parent=79 // pred_check
            _
          $region97: #{tpu_custom_call.1} parent=79 // pred_check_branch
            %660 = sbr.rel (0) target = $region99
          $region98: #{tpu_custom_call.1} parent=79 // pred_region
            %661 = vsyncadd [#allocation3], 512
          $region99: #{tpu_custom_call.1} parent=79 // pred_fallthru
            _
          %s662 = smul.u32 32, 1
          %s663 = sshll.u32 %s662, 4
          %664 = dma.done [#allocation3], %s663
        $region80: #{tpu_custom_call.1} parent=75 // pred_fallthru
          _
        %v665 = vld [vmem:[#allocation4] sm:$0xff]
        %v666 = vld [vmem:[#allocation4 + $0x8] sm:$0xff]
        %v667 = vld [vmem:[#allocation4 + $0x10] sm:$0xff]
        %v668 = vld [vmem:[#allocation4 + $0x18] sm:$0xff]
        %v669 = vld [vmem:[%s589] sm:$0x1]
        %v670 = vld [vmem:[%s592] sm:$0x1]
        %v671 = vld [vmem:[%s612] sm:$0x1]
        %v672 = vld [vmem:[%s615] sm:$0x1]
        %v673 = vld [vmem:[%s597] sm:$0xff]
        %v674 = vld [vmem:[%s597 + $0x8] sm:$0xff]
        %v675 = vld [vmem:[%s597 + $0x10] sm:$0xff]
        %v676 = vld [vmem:[%s597 + $0x18] sm:$0xff]
        %v677 = vld [vmem:[%s597 + $0x20] sm:$0xff]
        %v678 = vld [vmem:[%s597 + $0x28] sm:$0xff]
        %v679 = vld [vmem:[%s597 + $0x30] sm:$0xff]
        %v680 = vld [vmem:[%s597 + $0x38] sm:$0xff]
        %v681 = vld [vmem:[%s601] sm:$0x3]
        %v682 = vld [vmem:[%s606] sm:$0xf]
        %v683 = vld [vmem:[%s606 + $0x4] sm:$0xf]
        %v684 = vld [vmem:[%s606 + $0x8] sm:$0xf]
        %v685 = vld [vmem:[%s606 + $0xc] sm:$0xf]
        %v686 = vld [vmem:[%s606 + $0x10] sm:$0xf]
        %v687 = vld [vmem:[%s606 + $0x14] sm:$0xf]
        %v688 = vld [vmem:[%s606 + $0x18] sm:$0xf]
        %v689 = vld [vmem:[%s606 + $0x1c] sm:$0xf]
        %v690 = vld [vmem:[%s609] sm:$0x1]
        %v691 = vld [vmem:[%s620] sm:$0xff]
        %v692 = vld [vmem:[%s620 + $0x8] sm:$0xff]
        %v693 = vld [vmem:[%s620 + $0x10] sm:$0xff]
        %v694 = vld [vmem:[%s620 + $0x18] sm:$0xff]
        %v695 = vld [vmem:[%s620 + $0x20] sm:$0xff]
        %v696 = vld [vmem:[%s620 + $0x28] sm:$0xff]
        %v697 = vld [vmem:[%s620 + $0x30] sm:$0xff]
        %v698 = vld [vmem:[%s620 + $0x38] sm:$0xff]
        %v699 = vld [vmem:[%s624] sm:$0x3]
        %v700 = vld [vmem:[%s629] sm:$0xf]
        %v701 = vld [vmem:[%s629 + $0x4] sm:$0xf]
        %v702 = vld [vmem:[%s629 + $0x8] sm:$0xf]
        %v703 = vld [vmem:[%s629 + $0xc] sm:$0xf]
        %v704 = vld [vmem:[%s629 + $0x10] sm:$0xf]
        %v705 = vld [vmem:[%s629 + $0x14] sm:$0xf]
        %v706 = vld [vmem:[%s629 + $0x18] sm:$0xf]
        %v707 = vld [vmem:[%s629 + $0x1c] sm:$0xf]
        %v708 = vld [vmem:[%s629 + $0x20] sm:$0xf]
        %v709 = vld [vmem:[%s629 + $0x24] sm:$0xf]
        %v710 = vld [vmem:[%s629 + $0x28] sm:$0xf]
        %v711 = vld [vmem:[%s629 + $0x2c] sm:$0xf]
        %v712 = vld [vmem:[%s629 + $0x30] sm:$0xf]
        %v713 = vld [vmem:[%s629 + $0x34] sm:$0xf]
        %v714 = vld [vmem:[%s629 + $0x38] sm:$0xf]
        %v715 = vld [vmem:[%s629 + $0x3c] sm:$0xf]
        %v716 = vld [vmem:[%s629 + $0x40] sm:$0xf]
        %v717 = vld [vmem:[%s629 + $0x44] sm:$0xf]
        %v718 = vld [vmem:[%s629 + $0x48] sm:$0xf]
        %v719 = vld [vmem:[%s629 + $0x4c] sm:$0xf]
        %v720 = vld [vmem:[%s629 + $0x50] sm:$0xf]
        %v721 = vld [vmem:[%s629 + $0x54] sm:$0xf]
        %v722 = vld [vmem:[%s629 + $0x58] sm:$0xf]
        %v723 = vld [vmem:[%s629 + $0x5c] sm:$0xf]
        %v724 = vld [vmem:[%s629 + $0x60] sm:$0xf]
        %v725 = vld [vmem:[%s629 + $0x64] sm:$0xf]
        %v726 = vld [vmem:[%s629 + $0x68] sm:$0xf]
        %v727 = vld [vmem:[%s629 + $0x6c] sm:$0xf]
        %v728 = vld [vmem:[%s629 + $0x70] sm:$0xf]
        %v729 = vld [vmem:[%s629 + $0x74] sm:$0xf]
        %v730 = vld [vmem:[%s629 + $0x78] sm:$0xf]
        %v731 = vld [vmem:[%s629 + $0x7c] sm:$0xf]
        %v732 = vld [vmem:[%s632] sm:$0x1]
        %vm733 = vcmask 523264
        %v734 = vsel %vm733, %v665, 0.0
        %735 = vadd.xlane.f32.xlu0 %v734
        %v736 = vpop.xlane.xlu0 %735
        %v737 = vsel %vm733, %v666, 0.0
        %738 = vadd.xlane.f32.xlu0 %v737
        %v739 = vpop.xlane.xlu0 %738
        %v740 = vsel %vm733, %v667, 0.0
        %741 = vadd.xlane.f32.xlu0 %v740
        %v742 = vpop.xlane.xlu0 %741
        %v743 = vsel %vm733, %v668, 0.0
        %744 = vadd.xlane.f32.xlu0 %v743
        %v745 = vpop.xlane.xlu0 %744
        %v746 = vrcp.pop 64.0
        %v747 = vmul.f32 64.0, %v746
        %v748 = vsub.f32 1.0, %v747
        %v749 = vmul.f32 %v746, %v748
        %v750 = vadd.f32 %v746, %v749
        %vm751 = vweird.f32 %v746
        %v752 = vsel %vm751, %v746, %v750
        %v753 = vmul.f32 %v736, %v752
        %v754 = vmul.f32 %v739, %v752
        %v755 = vmul.f32 %v742, %v752
        %v756 = vmul.f32 %v745, %v752
        %v757 = vsub.f32 %v665, %v753
        %v758 = vsub.f32 %v666, %v754
        %v759 = vsub.f32 %v667, %v755
        %v760 = vsub.f32 %v668, %v756
        %v761 = vmul.f32 %v757, %v757
        %v762 = vmul.f32 %v758, %v758
        %v763 = vmul.f32 %v759, %v759
        %v764 = vmul.f32 %v760, %v760
        %v765 = vsel %vm733, %v761, 0.0
        %766 = vadd.xlane.f32.xlu0 %v765
        %v767 = vpop.xlane.xlu0 %766
        %v768 = vsel %vm733, %v762, 0.0
        %769 = vadd.xlane.f32.xlu0 %v768
        %v770 = vpop.xlane.xlu0 %769
        %v771 = vsel %vm733, %v763, 0.0
        %772 = vadd.xlane.f32.xlu0 %v771
        %v773 = vpop.xlane.xlu0 %772
        %v774 = vsel %vm733, %v764, 0.0
        %775 = vadd.xlane.f32.xlu0 %v774
        %v776 = vpop.xlane.xlu0 %775
        %v777 = vmul.f32 %v767, %v752
        %v778 = vmul.f32 %v770, %v752
        %v779 = vmul.f32 %v773, %v752
        %v780 = vmul.f32 %v776, %v752
        %v781 = vadd.f32 %v777, 1e-05
        %v782 = vadd.f32 %v778, 1e-05
        %v783 = vadd.f32 %v779, 1e-05
        %v784 = vadd.f32 %v780, 1e-05
        %v785 = vrsqrt.pop %v781
        %v786 = vmul.f32 %v785, %v781
        %v787 = vmul.f32 %v786, %v785
        %v788 = vmul.f32 0.5, %v787
        %v789 = vsub.f32 1.5, %v788
        %v790 = vmul.f32 %v785, %v789
        %vm791 = vweird.f32 %v781
        %vm792 = vweird.f32 %v785
        %vm793 = vmor %vm791, %vm792
        %v794 = vsel %vm793, %v785, %v790
        %v795 = vrsqrt.pop %v782
        %v796 = vmul.f32 %v795, %v782
        %v797 = vmul.f32 %v796, %v795
        %v798 = vmul.f32 0.5, %v797
        %v799 = vsub.f32 1.5, %v798
        %v800 = vmul.f32 %v795, %v799
        %vm801 = vweird.f32 %v782
        %vm802 = vweird.f32 %v795
        %vm803 = vmor %vm801, %vm802
        %v804 = vsel %vm803, %v795, %v800
        %v805 = vrsqrt.pop %v783
        %v806 = vmul.f32 %v805, %v783
        %v807 = vmul.f32 %v806, %v805
        %v808 = vmul.f32 0.5, %v807
        %v809 = vsub.f32 1.5, %v808
        %v810 = vmul.f32 %v805, %v809
        %vm811 = vweird.f32 %v783
        %vm812 = vweird.f32 %v805
        %vm813 = vmor %vm811, %vm812
        %v814 = vsel %vm813, %v805, %v810
        %v815 = vrsqrt.pop %v784
        %v816 = vmul.f32 %v815, %v784
        %v817 = vmul.f32 %v816, %v815
        %v818 = vmul.f32 0.5, %v817
        %v819 = vsub.f32 1.5, %v818
        %v820 = vmul.f32 %v815, %v819
        %vm821 = vweird.f32 %v784
        %vm822 = vweird.f32 %v815
        %vm823 = vmor %vm821, %vm822
        %v824 = vsel %vm823, %v815, %v820
        %v825 = vmul.f32 %v757, %v794
        %v826 = vmul.f32 %v758, %v804
        %v827 = vmul.f32 %v759, %v814
        %v828 = vmul.f32 %v760, %v824
        %v830 = vperm.slane %v669, 0
        %v832 = vmul.f32 %v825, %v830
        %v833 = vmul.f32 %v826, %v830
        %v834 = vmul.f32 %v827, %v830
        %v835 = vmul.f32 %v828, %v830
        %v837 = vperm.slane %v670, 0
        %v839 = vadd.f32 %v832, %v837
        %v840 = vadd.f32 %v833, %v837
        %v841 = vadd.f32 %v834, %v837
        %v842 = vadd.f32 %v835, %v837
        %v843 = vpack.c.bf16 %v840, %v839
        %v844 = vpack.c.bf16 %v842, %v841
        %v846 = vperm.slane %v681, 0
        %v847 = vperm.slane %v681, 1
        %v858 = vunpack.c.l.b16 %v673
        %v859 = vunpack.c.h.b16 %v673
        %v860 = vunpack.c.l.b16 %v674
        %v861 = vunpack.c.h.b16 %v674
        %v862 = vunpack.c.l.b16 %v675
        %v863 = vunpack.c.h.b16 %v675
        %v864 = vunpack.c.l.b16 %v676
        %v865 = vunpack.c.h.b16 %v676
        %v866 = vunpack.c.l.b16 %v677
        %v867 = vunpack.c.h.b16 %v677
        %v868 = vunpack.c.l.b16 %v678
        %v869 = vunpack.c.h.b16 %v678
        %v870 = vunpack.c.l.b16 %v679
        %v871 = vunpack.c.h.b16 %v679
        %v872 = vunpack.c.l.b16 %v680
        %v873 = vunpack.c.h.b16 %v680
        %v874 = vpack.c.b16 %v860, %v858
        %v875 = vpack.c.b16 %v861, %v859
        %v876 = vpack.c.b16 %v864, %v862
        %v877 = vpack.c.b16 %v865, %v863
        %v878 = vpack.c.b16 %v868, %v866
        %v879 = vpack.c.b16 %v869, %v867
        %v880 = vpack.c.b16 %v872, %v870
        %v881 = vpack.c.b16 %v873, %v871
        %v891 = vsel %vm733, %v843, 0
        %v894 = vsel %vm733, %v844, 0
        %896 = vmatpush.bf16.msra.mxu0 0
        %897 = vmatpush.bf16.msra.mxu0 0
        %898 = vmatpush.bf16.msra.mxu0 0
        %899 = vmatpush.bf16.msra.mxu0 0
        %900 = vmatpush.bf16.msra.mxu0 %v880
        %901 = vmatpush.bf16.msra.mxu0 %v878
        %902 = vmatpush.bf16.msra.mxu0 %v876
        %903 = vmatpush.bf16.msra.mxu0 %v874
        %904 = vmatmul.bf16.gmra.mxu0 %v891
        %v905 = vpop.f32.mrf.mxu0
        %v906 = vadd.f32 %v846, %v905
        %v907 = vpop.f32.mrf.mxu0
        %v908 = vadd.f32 %v846, %v907
        %909 = vmatmul.bf16.gmra.mxu0 %v894
        %v910 = vpop.f32.mrf.mxu0
        %v911 = vadd.f32 %v846, %v910
        %v912 = vpop.f32.mrf.mxu0
        %v913 = vadd.f32 %v846, %v912
        %914 = vdwg.mxu0
        %915 = vmatpush.bf16.msra.mxu0 0
        %916 = vmatpush.bf16.msra.mxu0 0
        %917 = vmatpush.bf16.msra.mxu0 0
        %918 = vmatpush.bf16.msra.mxu0 0
        %919 = vmatpush.bf16.msra.mxu0 %v881
        %920 = vmatpush.bf16.msra.mxu0 %v879
        %921 = vmatpush.bf16.msra.mxu0 %v877
        %922 = vmatpush.bf16.msra.mxu0 %v875
        %923 = vmatmul.bf16.gmra.mxu0 %v891
        %v924 = vpop.f32.mrf.mxu0
        %v925 = vadd.f32 %v847, %v924
        %v926 = vpop.f32.mrf.mxu0
        %v927 = vadd.f32 %v847, %v926
        %928 = vmatmul.bf16.gmra.mxu0 %v894
        %v929 = vpop.f32.mrf.mxu0
        %v930 = vadd.f32 %v847, %v929
        %v931 = vpop.f32.mrf.mxu0
        %v932 = vadd.f32 %v847, %v931
        %933 = vdwg.mxu0
        %v934 = vpack.c.bf16 %v925, %v906
        %v935 = vpack.c.bf16 %v927, %v908
        %v936 = vpack.c.bf16 %v930, %v911
        %v937 = vpack.c.bf16 %v932, %v913
        %v938 = vlaneseq
        %v939 = vshrl.u32 %v938, 7
        %v940 = vadd.s32 %v939, 8
        %v941 = vlaneseq
        %v942 = vand.u32 %v941, 127
        %vm943 = vcmp.ge.s32.totalorder %v939, %v942
        %vm944 = vcmp.ge.s32.totalorder %v940, %v942
        %v945 = vsel %vm943, 0.0, -1e+30
        %v946 = vsel %vm944, 0.0, -1e+30
        %v951 = vrot.slane %v934, 4
        %v952 = vrot.slane %v935, 4
        %v953 = vrot.slane %v936, 4
        %v954 = vrot.slane %v937, 4
        %v955 = vunpack.c.l.b16 %v934
        %v956 = vunpack.c.l.b16 %v935
        %v957 = vpack.c.b16 %v956, %v955
        %958 = vrot.lane.b32.xlu0 %v957, 64
        %v959 = vpop.permute.xlu0 %958
        %vm960 = vcmask 130048
        %v962 = vsel %vm960, %v957, 0
        %v965 = vsel %vm960, %v959, 0
        %967 = vmatpush.bf16.xpose.msra.mxu0 0
        %968 = vmatpush.bf16.xpose.msra.mxu0 0
        %969 = vmatpush.bf16.xpose.msra.mxu0 0
        %970 = vmatpush.bf16.xpose.msra.mxu0 0
        %971 = vmatpush.bf16.xpose.msra.mxu0 0
        %972 = vmatpush.bf16.xpose.msra.mxu0 0
        %973 = vmatpush.bf16.xpose.msra.mxu0 0
        %974 = vmatpush.bf16.xpose.msra.mxu0 %v965
        %975 = vmatmul.bf16.gmra.mxu0 %v962
        %v976 = vpop.f32.mrf.mxu0
        %v977 = vadd.f32 %v945, %v976
        %v978 = vpop.f32.mrf.mxu0
        %v979 = vadd.f32 %v946, %v978
        %980 = vdwg.mxu0
        %v981 = vunpack.c.l.b16 %v936
        %v982 = vunpack.c.l.b16 %v937
        %v983 = vpack.c.b16 %v982, %v981
        %984 = vrot.lane.b32.xlu0 %v983, 64
        %v985 = vpop.permute.xlu0 %984
        %v987 = vsel %vm960, %v983, 0
        %v990 = vsel %vm960, %v985, 0
        %992 = vmatpush.bf16.xpose.msra.mxu0 0
        %993 = vmatpush.bf16.xpose.msra.mxu0 0
        %994 = vmatpush.bf16.xpose.msra.mxu0 0
        %995 = vmatpush.bf16.xpose.msra.mxu0 0
        %996 = vmatpush.bf16.xpose.msra.mxu0 0
        %997 = vmatpush.bf16.xpose.msra.mxu0 0
        %998 = vmatpush.bf16.xpose.msra.mxu0 0
        %999 = vmatpush.bf16.xpose.msra.mxu0 %v990
        %1000 = vmatmul.bf16.gmra.mxu0 %v987
        %v1001 = vpop.f32.mrf.mxu0
        %v1002 = vadd.f32 %v945, %v1001
        %v1003 = vpop.f32.mrf.mxu0
        %v1004 = vadd.f32 %v946, %v1003
        %1005 = vdwg.mxu0
        %v1006 = vsel %vm960, %v977, -inf
        %1007 = vmax.xlane.f32.xlu0 %v1006
        %v1008 = vpop.xlane.xlu0 %1007
        %v1009 = vsel %vm960, %v979, -inf
        %1010 = vmax.xlane.f32.xlu0 %v1009
        %v1011 = vpop.xlane.xlu0 %1010
        %v1012 = vsel %vm960, %v1002, -inf
        %1013 = vmax.xlane.f32.xlu0 %v1012
        %v1014 = vpop.xlane.xlu0 %1013
        %v1015 = vsel %vm960, %v1004, -inf
        %1016 = vmax.xlane.f32.xlu0 %v1015
        %v1017 = vpop.xlane.xlu0 %1016
        %v1018 = vsub.f32 %v977, %v1008
        %v1019 = vsub.f32 %v979, %v1011
        %v1020 = vsub.f32 %v1002, %v1014
        %v1021 = vsub.f32 %v1004, %v1017
        %v1022 = vmul.f32 %v1018, 1.442695
        %v1023 = vpow.pop %v1022
        %v1024 = vmul.f32 %v1019, 1.442695
        %v1025 = vpow.pop %v1024
        %v1026 = vmul.f32 %v1020, 1.442695
        %v1027 = vpow.pop %v1026
        %v1028 = vmul.f32 %v1021, 1.442695
        %v1029 = vpow.pop %v1028
        %v1030 = vsel %vm960, %v1023, 0.0
        %1031 = vadd.xlane.f32.xlu0 %v1030
        %v1032 = vpop.xlane.xlu0 %1031
        %v1033 = vsel %vm960, %v1025, 0.0
        %1034 = vadd.xlane.f32.xlu0 %v1033
        %v1035 = vpop.xlane.xlu0 %1034
        %v1036 = vsel %vm960, %v1027, 0.0
        %1037 = vadd.xlane.f32.xlu0 %v1036
        %v1038 = vpop.xlane.xlu0 %1037
        %v1039 = vsel %vm960, %v1029, 0.0
        %1040 = vadd.xlane.f32.xlu0 %v1039
        %v1041 = vpop.xlane.xlu0 %1040
        %v1042 = vrcp.pop %v1032
        %v1043 = vrcp.pop %v1035
        %v1044 = vrcp.pop %v1038
        %v1045 = vrcp.pop %v1041
        %v1046 = vmul.f32 %v1023, %v1042
        %v1047 = vmul.f32 %v1025, %v1043
        %v1048 = vmul.f32 %v1027, %v1044
        %v1049 = vmul.f32 %v1029, %v1045
        %v1050 = vpack.c.bf16 %v1046, %v1046
        %v1051 = vpack.c.bf16 %v1047, %v1047
        %v1052 = vpack.c.bf16 %v1048, %v1048
        %v1053 = vpack.c.bf16 %v1049, %v1049
        %v1056 = vunpack.c.l.b16 %v1050
        %v1057 = vunpack.c.l.b16 %v1051
        %v1058 = vpack.c.b16 %v1057, %v1056
        %v1059 = vunpack.c.l.b16 %v951
        %v1060 = vunpack.c.l.b16 %v952
        %v1061 = vpack.c.b16 %v1060, %v1059
        %v1064 = vsel %vm960, %v1058, 0
        %1066 = vmatpush.bf16.msra.mxu0 0
        %1067 = vmatpush.bf16.msra.mxu0 0
        %1068 = vmatpush.bf16.msra.mxu0 0
        %1069 = vmatpush.bf16.msra.mxu0 0
        %1070 = vmatpush.bf16.msra.mxu0 0
        %1071 = vmatpush.bf16.msra.mxu0 0
        %1072 = vmatpush.bf16.msra.mxu0 0
        %1073 = vmatpush.bf16.msra.mxu0 %v1061
        %1074 = vmatmul.bf16.gmra.mxu0 %v1064
        %v1075 = vpop.f32.mrf.mxu0
        %v1076 = vadd.f32 0.0, %v1075
        %v1077 = vpop.f32.mrf.mxu0
        %v1078 = vadd.f32 0.0, %v1077
        %1079 = vdwg.mxu0
        %v1082 = vunpack.c.l.b16 %v1052
        %v1083 = vunpack.c.l.b16 %v1053
        %v1084 = vpack.c.b16 %v1083, %v1082
        %v1085 = vunpack.c.l.b16 %v953
        %v1086 = vunpack.c.l.b16 %v954
        %v1087 = vpack.c.b16 %v1086, %v1085
        %v1090 = vsel %vm960, %v1084, 0
        %1092 = vmatpush.bf16.msra.mxu0 0
        %1093 = vmatpush.bf16.msra.mxu0 0
        %1094 = vmatpush.bf16.msra.mxu0 0
        %1095 = vmatpush.bf16.msra.mxu0 0
        %1096 = vmatpush.bf16.msra.mxu0 0
        %1097 = vmatpush.bf16.msra.mxu0 0
        %1098 = vmatpush.bf16.msra.mxu0 0
        %1099 = vmatpush.bf16.msra.mxu0 %v1087
        %1100 = vmatmul.bf16.gmra.mxu0 %v1090
        %v1101 = vpop.f32.mrf.mxu0
        %v1102 = vadd.f32 0.0, %v1101
        %v1103 = vpop.f32.mrf.mxu0
        %v1104 = vadd.f32 0.0, %v1103
        %1105 = vdwg.mxu0
        %v1106 = vpack.c.bf16 %v1076, %v1076
        %v1107 = vpack.c.bf16 %v1078, %v1078
        %v1108 = vpack.c.bf16 %v1102, %v1102
        %v1109 = vpack.c.bf16 %v1104, %v1104
        %vm1110 = vcmask 125952
        %1111 = vst.msk [vmem:[#allocation2] sm:$0xf] %vm1110, %v1106
        %1112 = vst.msk [vmem:[#allocation2 + $0x4] sm:$0xf] %vm1110, %v1107
        %1113 = vst.msk [vmem:[#allocation2 + $0x8] sm:$0xf] %vm1110, %v1108
        %1114 = vst.msk [vmem:[#allocation2 + $0xc] sm:$0xf] %vm1110, %v1109
        %1115 = vrot.lane.b32.xlu0 %v934, 112
        %v1116 = vpop.permute.xlu0 %1115
        %1117 = vrot.lane.b32.xlu0 %v935, 112
        %v1118 = vpop.permute.xlu0 %1117
        %1119 = vrot.lane.b32.xlu0 %v936, 112
        %v1120 = vpop.permute.xlu0 %1119
        %1121 = vrot.lane.b32.xlu0 %v937, 112
        %v1122 = vpop.permute.xlu0 %1121
        %v1123 = vrot.slane %v1116, 4
        %v1124 = vrot.slane %v1118, 4
        %v1125 = vrot.slane %v1120, 4
        %v1126 = vrot.slane %v1122, 4
        %1127 = vrot.lane.b32.xlu0 %v957, 112
        %v1128 = vpop.permute.xlu0 %1127
        %1129 = vrot.lane.b32.xlu0 %v957, 48
        %v1130 = vpop.permute.xlu0 %1129
        %v1132 = vsel %vm960, %v1128, 0
        %v1135 = vsel %vm960, %v1130, 0
        %1137 = vmatpush.bf16.xpose.msra.mxu0 0
        %1138 = vmatpush.bf16.xpose.msra.mxu0 0
        %1139 = vmatpush.bf16.xpose.msra.mxu0 0
        %1140 = vmatpush.bf16.xpose.msra.mxu0 0
        %1141 = vmatpush.bf16.xpose.msra.mxu0 0
        %1142 = vmatpush.bf16.xpose.msra.mxu0 0
        %1143 = vmatpush.bf16.xpose.msra.mxu0 0
        %1144 = vmatpush.bf16.xpose.msra.mxu0 %v1135
        %1145 = vmatmul.bf16.gmra.mxu0 %v1132
        %v1146 = vpop.f32.mrf.mxu0
        %v1147 = vadd.f32 %v945, %v1146
        %v1148 = vpop.f32.mrf.mxu0
        %v1149 = vadd.f32 %v946, %v1148
        %1150 = vdwg.mxu0
        %1151 = vrot.lane.b32.xlu0 %v983, 112
        %v1152 = vpop.permute.xlu0 %1151
        %1153 = vrot.lane.b32.xlu0 %v983, 48
        %v1154 = vpop.permute.xlu0 %1153
        %v1156 = vsel %vm960, %v1152, 0
        %v1159 = vsel %vm960, %v1154, 0
        %1161 = vmatpush.bf16.xpose.msra.mxu0 0
        %1162 = vmatpush.bf16.xpose.msra.mxu0 0
        %1163 = vmatpush.bf16.xpose.msra.mxu0 0
        %1164 = vmatpush.bf16.xpose.msra.mxu0 0
        %1165 = vmatpush.bf16.xpose.msra.mxu0 0
        %1166 = vmatpush.bf16.xpose.msra.mxu0 0
        %1167 = vmatpush.bf16.xpose.msra.mxu0 0
        %1168 = vmatpush.bf16.xpose.msra.mxu0 %v1159
        %1169 = vmatmul.bf16.gmra.mxu0 %v1156
        %v1170 = vpop.f32.mrf.mxu0
        %v1171 = vadd.f32 %v945, %v1170
        %v1172 = vpop.f32.mrf.mxu0
        %v1173 = vadd.f32 %v946, %v1172
        %1174 = vdwg.mxu0
        %v1175 = vsel %vm960, %v1147, -inf
        %1176 = vmax.xlane.f32.xlu0 %v1175
        %v1177 = vpop.xlane.xlu0 %1176
        %v1178 = vsel %vm960, %v1149, -inf
        %1179 = vmax.xlane.f32.xlu0 %v1178
        %v1180 = vpop.xlane.xlu0 %1179
        %v1181 = vsel %vm960, %v1171, -inf
        %1182 = vmax.xlane.f32.xlu0 %v1181
        %v1183 = vpop.xlane.xlu0 %1182
        %v1184 = vsel %vm960, %v1173, -inf
        %1185 = vmax.xlane.f32.xlu0 %v1184
        %v1186 = vpop.xlane.xlu0 %1185
        %v1187 = vsub.f32 %v1147, %v1177
        %v1188 = vsub.f32 %v1149, %v1180
        %v1189 = vsub.f32 %v1171, %v1183
        %v1190 = vsub.f32 %v1173, %v1186
        %v1191 = vmul.f32 %v1187, 1.442695
        %v1192 = vpow.pop %v1191
        %v1193 = vmul.f32 %v1188, 1.442695
        %v1194 = vpow.pop %v1193
        %v1195 = vmul.f32 %v1189, 1.442695
        %v1196 = vpow.pop %v1195
        %v1197 = vmul.f32 %v1190, 1.442695
        %v1198 = vpow.pop %v1197
        %v1199 = vsel %vm960, %v1192, 0.0
        %1200 = vadd.xlane.f32.xlu0 %v1199
        %v1201 = vpop.xlane.xlu0 %1200
        %v1202 = vsel %vm960, %v1194, 0.0
        %1203 = vadd.xlane.f32.xlu0 %v1202
        %v1204 = vpop.xlane.xlu0 %1203
        %v1205 = vsel %vm960, %v1196, 0.0
        %1206 = vadd.xlane.f32.xlu0 %v1205
        %v1207 = vpop.xlane.xlu0 %1206
        %v1208 = vsel %vm960, %v1198, 0.0
        %1209 = vadd.xlane.f32.xlu0 %v1208
        %v1210 = vpop.xlane.xlu0 %1209
        %v1211 = vrcp.pop %v1201
        %v1212 = vrcp.pop %v1204
        %v1213 = vrcp.pop %v1207
        %v1214 = vrcp.pop %v1210
        %v1215 = vmul.f32 %v1192, %v1211
        %v1216 = vmul.f32 %v1194, %v1212
        %v1217 = vmul.f32 %v1196, %v1213
        %v1218 = vmul.f32 %v1198, %v1214
        %v1219 = vpack.c.bf16 %v1215, %v1215
        %v1220 = vpack.c.bf16 %v1216, %v1216
        %v1221 = vpack.c.bf16 %v1217, %v1217
        %v1222 = vpack.c.bf16 %v1218, %v1218
        %v1225 = vunpack.c.l.b16 %v1219
        %v1226 = vunpack.c.l.b16 %v1220
        %v1227 = vpack.c.b16 %v1226, %v1225
        %v1228 = vunpack.c.l.b16 %v1123
        %v1229 = vunpack.c.l.b16 %v1124
        %v1230 = vpack.c.b16 %v1229, %v1228
        %v1233 = vsel %vm960, %v1227, 0
        %1235 = vmatpush.bf16.msra.mxu0 0
        %1236 = vmatpush.bf16.msra.mxu0 0
        %1237 = vmatpush.bf16.msra.mxu0 0
        %1238 = vmatpush.bf16.msra.mxu0 0
        %1239 = vmatpush.bf16.msra.mxu0 0
        %1240 = vmatpush.bf16.msra.mxu0 0
        %1241 = vmatpush.bf16.msra.mxu0 0
        %1242 = vmatpush.bf16.msra.mxu0 %v1230
        %1243 = vmatmul.bf16.gmra.mxu0 %v1233
        %v1244 = vpop.f32.mrf.mxu0
        %v1245 = vadd.f32 0.0, %v1244
        %v1246 = vpop.f32.mrf.mxu0
        %v1247 = vadd.f32 0.0, %v1246
        %1248 = vdwg.mxu0
        %v1251 = vunpack.c.l.b16 %v1221
        %v1252 = vunpack.c.l.b16 %v1222
        %v1253 = vpack.c.b16 %v1252, %v1251
        %v1254 = vunpack.c.l.b16 %v1125
        %v1255 = vunpack.c.l.b16 %v1126
        %v1256 = vpack.c.b16 %v1255, %v1254
        %v1259 = vsel %vm960, %v1253, 0
        %1261 = vmatpush.bf16.msra.mxu0 0
        %1262 = vmatpush.bf16.msra.mxu0 0
        %1263 = vmatpush.bf16.msra.mxu0 0
        %1264 = vmatpush.bf16.msra.mxu0 0
        %1265 = vmatpush.bf16.msra.mxu0 0
        %1266 = vmatpush.bf16.msra.mxu0 0
        %1267 = vmatpush.bf16.msra.mxu0 0
        %1268 = vmatpush.bf16.msra.mxu0 %v1256
        %1269 = vmatmul.bf16.gmra.mxu0 %v1259
        %v1270 = vpop.f32.mrf.mxu0
        %v1271 = vadd.f32 0.0, %v1270
        %v1272 = vpop.f32.mrf.mxu0
        %v1273 = vadd.f32 0.0, %v1272
        %1274 = vdwg.mxu0
        %v1275 = vpack.c.bf16 %v1245, %v1245
        %v1276 = vpack.c.bf16 %v1247, %v1247
        %v1277 = vpack.c.bf16 %v1271, %v1271
        %v1278 = vpack.c.bf16 %v1273, %v1273
        %1283 = vrot.lane.b32.xlu0 %v1275, 16
        %v1284 = vpop.permute.xlu0 %1283
        %1285 = vrot.lane.b32.xlu0 %v1276, 16
        %v1286 = vpop.permute.xlu0 %1285
        %1287 = vrot.lane.b32.xlu0 %v1277, 16
        %v1288 = vpop.permute.xlu0 %1287
        %1289 = vrot.lane.b32.xlu0 %v1278, 16
        %v1290 = vpop.permute.xlu0 %1289
        %vm1295 = vcmask 257152
        %1296 = vst.msk [vmem:[#allocation2] sm:$0xf] %vm1295, %v1284
        %1297 = vst.msk [vmem:[#allocation2 + $0x4] sm:$0xf] %vm1295, %v1286
        %1298 = vst.msk [vmem:[#allocation2 + $0x8] sm:$0xf] %vm1295, %v1288
        %1299 = vst.msk [vmem:[#allocation2 + $0xc] sm:$0xf] %vm1295, %v1290
        %1300 = vrot.lane.b32.xlu0 %v934, 96
        %v1301 = vpop.permute.xlu0 %1300
        %1302 = vrot.lane.b32.xlu0 %v935, 96
        %v1303 = vpop.permute.xlu0 %1302
        %1304 = vrot.lane.b32.xlu0 %v936, 96
        %v1305 = vpop.permute.xlu0 %1304
        %1306 = vrot.lane.b32.xlu0 %v937, 96
        %v1307 = vpop.permute.xlu0 %1306
        %v1308 = vrot.slane %v1301, 4
        %v1309 = vrot.slane %v1303, 4
        %v1310 = vrot.slane %v1305, 4
        %v1311 = vrot.slane %v1307, 4
        %1312 = vrot.lane.b32.xlu0 %v957, 96
        %v1313 = vpop.permute.xlu0 %1312
        %1314 = vrot.lane.b32.xlu0 %v957, 32
        %v1315 = vpop.permute.xlu0 %1314
        %v1317 = vsel %vm960, %v1313, 0
        %v1320 = vsel %vm960, %v1315, 0
        %1322 = vmatpush.bf16.xpose.msra.mxu0 0
        %1323 = vmatpush.bf16.xpose.msra.mxu0 0
        %1324 = vmatpush.bf16.xpose.msra.mxu0 0
        %1325 = vmatpush.bf16.xpose.msra.mxu0 0
        %1326 = vmatpush.bf16.xpose.msra.mxu0 0
        %1327 = vmatpush.bf16.xpose.msra.mxu0 0
        %1328 = vmatpush.bf16.xpose.msra.mxu0 0
        %1329 = vmatpush.bf16.xpose.msra.mxu0 %v1320
        %1330 = vmatmul.bf16.gmra.mxu0 %v1317
        %v1331 = vpop.f32.mrf.mxu0
        %v1332 = vadd.f32 %v945, %v1331
        %v1333 = vpop.f32.mrf.mxu0
        %v1334 = vadd.f32 %v946, %v1333
        %1335 = vdwg.mxu0
        %1336 = vrot.lane.b32.xlu0 %v983, 96
        %v1337 = vpop.permute.xlu0 %1336
        %1338 = vrot.lane.b32.xlu0 %v983, 32
        %v1339 = vpop.permute.xlu0 %1338
        %v1341 = vsel %vm960, %v1337, 0
        %v1344 = vsel %vm960, %v1339, 0
        %1346 = vmatpush.bf16.xpose.msra.mxu0 0
        %1347 = vmatpush.bf16.xpose.msra.mxu0 0
        %1348 = vmatpush.bf16.xpose.msra.mxu0 0
        %1349 = vmatpush.bf16.xpose.msra.mxu0 0
        %1350 = vmatpush.bf16.xpose.msra.mxu0 0
        %1351 = vmatpush.bf16.xpose.msra.mxu0 0
        %1352 = vmatpush.bf16.xpose.msra.mxu0 0
        %1353 = vmatpush.bf16.xpose.msra.mxu0 %v1344
        %1354 = vmatmul.bf16.gmra.mxu0 %v1341
        %v1355 = vpop.f32.mrf.mxu0
        %v1356 = vadd.f32 %v945, %v1355
        %v1357 = vpop.f32.mrf.mxu0
        %v1358 = vadd.f32 %v946, %v1357
        %1359 = vdwg.mxu0
        %v1360 = vsel %vm960, %v1332, -inf
        %1361 = vmax.xlane.f32.xlu0 %v1360
        %v1362 = vpop.xlane.xlu0 %1361
        %v1363 = vsel %vm960, %v1334, -inf
        %1364 = vmax.xlane.f32.xlu0 %v1363
        %v1365 = vpop.xlane.xlu0 %1364
        %v1366 = vsel %vm960, %v1356, -inf
        %1367 = vmax.xlane.f32.xlu0 %v1366
        %v1368 = vpop.xlane.xlu0 %1367
        %v1369 = vsel %vm960, %v1358, -inf
        %1370 = vmax.xlane.f32.xlu0 %v1369
        %v1371 = vpop.xlane.xlu0 %1370
        %v1372 = vsub.f32 %v1332, %v1362
        %v1373 = vsub.f32 %v1334, %v1365
        %v1374 = vsub.f32 %v1356, %v1368
        %v1375 = vsub.f32 %v1358, %v1371
        %v1376 = vmul.f32 %v1372, 1.442695
        %v1377 = vpow.pop %v1376
        %v1378 = vmul.f32 %v1373, 1.442695
        %v1379 = vpow.pop %v1378
        %v1380 = vmul.f32 %v1374, 1.442695
        %v1381 = vpow.pop %v1380
        %v1382 = vmul.f32 %v1375, 1.442695
        %v1383 = vpow.pop %v1382
        %v1384 = vsel %vm960, %v1377, 0.0
        %1385 = vadd.xlane.f32.xlu0 %v1384
        %v1386 = vpop.xlane.xlu0 %1385
        %v1387 = vsel %vm960, %v1379, 0.0
        %1388 = vadd.xlane.f32.xlu0 %v1387
        %v1389 = vpop.xlane.xlu0 %1388
        %v1390 = vsel %vm960, %v1381, 0.0
        %1391 = vadd.xlane.f32.xlu0 %v1390
        %v1392 = vpop.xlane.xlu0 %1391
        %v1393 = vsel %vm960, %v1383, 0.0
        %1394 = vadd.xlane.f32.xlu0 %v1393
        %v1395 = vpop.xlane.xlu0 %1394
        %v1396 = vrcp.pop %v1386
        %v1397 = vrcp.pop %v1389
        %v1398 = vrcp.pop %v1392
        %v1399 = vrcp.pop %v1395
        %v1400 = vmul.f32 %v1377, %v1396
        %v1401 = vmul.f32 %v1379, %v1397
        %v1402 = vmul.f32 %v1381, %v1398
        %v1403 = vmul.f32 %v1383, %v1399
        %v1404 = vpack.c.bf16 %v1400, %v1400
        %v1405 = vpack.c.bf16 %v1401, %v1401
        %v1406 = vpack.c.bf16 %v1402, %v1402
        %v1407 = vpack.c.bf16 %v1403, %v1403
        %v1410 = vunpack.c.l.b16 %v1404
        %v1411 = vunpack.c.l.b16 %v1405
        %v1412 = vpack.c.b16 %v1411, %v1410
        %v1413 = vunpack.c.l.b16 %v1308
        %v1414 = vunpack.c.l.b16 %v1309
        %v1415 = vpack.c.b16 %v1414, %v1413
        %v1418 = vsel %vm960, %v1412, 0
        %1420 = vmatpush.bf16.msra.mxu0 0
        %1421 = vmatpush.bf16.msra.mxu0 0
        %1422 = vmatpush.bf16.msra.mxu0 0
        %1423 = vmatpush.bf16.msra.mxu0 0
        %1424 = vmatpush.bf16.msra.mxu0 0
        %1425 = vmatpush.bf16.msra.mxu0 0
        %1426 = vmatpush.bf16.msra.mxu0 0
        %1427 = vmatpush.bf16.msra.mxu0 %v1415
        %1428 = vmatmul.bf16.gmra.mxu0 %v1418
        %v1429 = vpop.f32.mrf.mxu0
        %v1430 = vadd.f32 0.0, %v1429
        %v1431 = vpop.f32.mrf.mxu0
        %v1432 = vadd.f32 0.0, %v1431
        %1433 = vdwg.mxu0
        %v1436 = vunpack.c.l.b16 %v1406
        %v1437 = vunpack.c.l.b16 %v1407
        %v1438 = vpack.c.b16 %v1437, %v1436
        %v1439 = vunpack.c.l.b16 %v1310
        %v1440 = vunpack.c.l.b16 %v1311
        %v1441 = vpack.c.b16 %v1440, %v1439
        %v1444 = vsel %vm960, %v1438, 0
        %1446 = vmatpush.bf16.msra.mxu0 0
        %1447 = vmatpush.bf16.msra.mxu0 0
        %1448 = vmatpush.bf16.msra.mxu0 0
        %1449 = vmatpush.bf16.msra.mxu0 0
        %1450 = vmatpush.bf16.msra.mxu0 0
        %1451 = vmatpush.bf16.msra.mxu0 0
        %1452 = vmatpush.bf16.msra.mxu0 0
        %1453 = vmatpush.bf16.msra.mxu0 %v1441
        %1454 = vmatmul.bf16.gmra.mxu0 %v1444
        %v1455 = vpop.f32.mrf.mxu0
        %v1456 = vadd.f32 0.0, %v1455
        %v1457 = vpop.f32.mrf.mxu0
        %v1458 = vadd.f32 0.0, %v1457
        %1459 = vdwg.mxu0
        %v1460 = vpack.c.bf16 %v1430, %v1430
        %v1461 = vpack.c.bf16 %v1432, %v1432
        %v1462 = vpack.c.bf16 %v1456, %v1456
        %v1463 = vpack.c.bf16 %v1458, %v1458
        %1468 = vrot.lane.b32.xlu0 %v1460, 32
        %v1469 = vpop.permute.xlu0 %1468
        %1470 = vrot.lane.b32.xlu0 %v1461, 32
        %v1471 = vpop.permute.xlu0 %1470
        %1472 = vrot.lane.b32.xlu0 %v1462, 32
        %v1473 = vpop.permute.xlu0 %1472
        %1474 = vrot.lane.b32.xlu0 %v1463, 32
        %v1475 = vpop.permute.xlu0 %1474
        %vm1480 = vcmask 388352
        %1481 = vst.msk [vmem:[#allocation2] sm:$0xf] %vm1480, %v1469
        %1482 = vst.msk [vmem:[#allocation2 + $0x4] sm:$0xf] %vm1480, %v1471
        %1483 = vst.msk [vmem:[#allocation2 + $0x8] sm:$0xf] %vm1480, %v1473
        %1484 = vst.msk [vmem:[#allocation2 + $0xc] sm:$0xf] %vm1480, %v1475
        %1485 = vrot.lane.b32.xlu0 %v934, 80
        %v1486 = vpop.permute.xlu0 %1485
        %1487 = vrot.lane.b32.xlu0 %v935, 80
        %v1488 = vpop.permute.xlu0 %1487
        %1489 = vrot.lane.b32.xlu0 %v936, 80
        %v1490 = vpop.permute.xlu0 %1489
        %1491 = vrot.lane.b32.xlu0 %v937, 80
        %v1492 = vpop.permute.xlu0 %1491
        %v1493 = vrot.slane %v1486, 4
        %v1494 = vrot.slane %v1488, 4
        %v1495 = vrot.slane %v1490, 4
        %v1496 = vrot.slane %v1492, 4
        %1497 = vrot.lane.b32.xlu0 %v957, 80
        %v1498 = vpop.permute.xlu0 %1497
        %1499 = vrot.lane.b32.xlu0 %v957, 16
        %v1500 = vpop.permute.xlu0 %1499
        %v1502 = vsel %vm960, %v1498, 0
        %v1505 = vsel %vm960, %v1500, 0
        %1507 = vmatpush.bf16.xpose.msra.mxu0 0
        %1508 = vmatpush.bf16.xpose.msra.mxu0 0
        %1509 = vmatpush.bf16.xpose.msra.mxu0 0
        %1510 = vmatpush.bf16.xpose.msra.mxu0 0
        %1511 = vmatpush.bf16.xpose.msra.mxu0 0
        %1512 = vmatpush.bf16.xpose.msra.mxu0 0
        %1513 = vmatpush.bf16.xpose.msra.mxu0 0
        %1514 = vmatpush.bf16.xpose.msra.mxu0 %v1505
        %1515 = vmatmul.bf16.gmra.mxu0 %v1502
        %v1516 = vpop.f32.mrf.mxu0
        %v1517 = vadd.f32 %v945, %v1516
        %v1518 = vpop.f32.mrf.mxu0
        %v1519 = vadd.f32 %v946, %v1518
        %1520 = vdwg.mxu0
        %1521 = vrot.lane.b32.xlu0 %v983, 80
        %v1522 = vpop.permute.xlu0 %1521
        %1523 = vrot.lane.b32.xlu0 %v983, 16
        %v1524 = vpop.permute.xlu0 %1523
        %v1526 = vsel %vm960, %v1522, 0
        %v1529 = vsel %vm960, %v1524, 0
        %1531 = vmatpush.bf16.xpose.msra.mxu0 0
        %1532 = vmatpush.bf16.xpose.msra.mxu0 0
        %1533 = vmatpush.bf16.xpose.msra.mxu0 0
        %1534 = vmatpush.bf16.xpose.msra.mxu0 0
        %1535 = vmatpush.bf16.xpose.msra.mxu0 0
        %1536 = vmatpush.bf16.xpose.msra.mxu0 0
        %1537 = vmatpush.bf16.xpose.msra.mxu0 0
        %1538 = vmatpush.bf16.xpose.msra.mxu0 %v1529
        %1539 = vmatmul.bf16.gmra.mxu0 %v1526
        %v1540 = vpop.f32.mrf.mxu0
        %v1541 = vadd.f32 %v945, %v1540
        %v1542 = vpop.f32.mrf.mxu0
        %v1543 = vadd.f32 %v946, %v1542
        %1544 = vdwg.mxu0
        %v1545 = vsel %vm960, %v1517, -inf
        %1546 = vmax.xlane.f32.xlu0 %v1545
        %v1547 = vpop.xlane.xlu0 %1546
        %v1548 = vsel %vm960, %v1519, -inf
        %1549 = vmax.xlane.f32.xlu0 %v1548
        %v1550 = vpop.xlane.xlu0 %1549
        %v1551 = vsel %vm960, %v1541, -inf
        %1552 = vmax.xlane.f32.xlu0 %v1551
        %v1553 = vpop.xlane.xlu0 %1552
        %v1554 = vsel %vm960, %v1543, -inf
        %1555 = vmax.xlane.f32.xlu0 %v1554
        %v1556 = vpop.xlane.xlu0 %1555
        %v1557 = vsub.f32 %v1517, %v1547
        %v1558 = vsub.f32 %v1519, %v1550
        %v1559 = vsub.f32 %v1541, %v1553
        %v1560 = vsub.f32 %v1543, %v1556
        %v1561 = vmul.f32 %v1557, 1.442695
        %v1562 = vpow.pop %v1561
        %v1563 = vmul.f32 %v1558, 1.442695
        %v1564 = vpow.pop %v1563
        %v1565 = vmul.f32 %v1559, 1.442695
        %v1566 = vpow.pop %v1565
        %v1567 = vmul.f32 %v1560, 1.442695
        %v1568 = vpow.pop %v1567
        %v1569 = vsel %vm960, %v1562, 0.0
        %1570 = vadd.xlane.f32.xlu0 %v1569
        %v1571 = vpop.xlane.xlu0 %1570
        %v1572 = vsel %vm960, %v1564, 0.0
        %1573 = vadd.xlane.f32.xlu0 %v1572
        %v1574 = vpop.xlane.xlu0 %1573
        %v1575 = vsel %vm960, %v1566, 0.0
        %1576 = vadd.xlane.f32.xlu0 %v1575
        %v1577 = vpop.xlane.xlu0 %1576
        %v1578 = vsel %vm960, %v1568, 0.0
        %1579 = vadd.xlane.f32.xlu0 %v1578
        %v1580 = vpop.xlane.xlu0 %1579
        %v1581 = vrcp.pop %v1571
        %v1582 = vrcp.pop %v1574
        %v1583 = vrcp.pop %v1577
        %v1584 = vrcp.pop %v1580
        %v1585 = vmul.f32 %v1562, %v1581
        %v1586 = vmul.f32 %v1564, %v1582
        %v1587 = vmul.f32 %v1566, %v1583
        %v1588 = vmul.f32 %v1568, %v1584
        %v1589 = vpack.c.bf16 %v1585, %v1585
        %v1590 = vpack.c.bf16 %v1586, %v1586
        %v1591 = vpack.c.bf16 %v1587, %v1587
        %v1592 = vpack.c.bf16 %v1588, %v1588
        %v1595 = vunpack.c.l.b16 %v1589
        %v1596 = vunpack.c.l.b16 %v1590
        %v1597 = vpack.c.b16 %v1596, %v1595
        %v1598 = vunpack.c.l.b16 %v1493
        %v1599 = vunpack.c.l.b16 %v1494
        %v1600 = vpack.c.b16 %v1599, %v1598
        %v1603 = vsel %vm960, %v1597, 0
        %1605 = vmatpush.bf16.msra.mxu0 0
        %1606 = vmatpush.bf16.msra.mxu0 0
        %1607 = vmatpush.bf16.msra.mxu0 0
        %1608 = vmatpush.bf16.msra.mxu0 0
        %1609 = vmatpush.bf16.msra.mxu0 0
        %1610 = vmatpush.bf16.msra.mxu0 0
        %1611 = vmatpush.bf16.msra.mxu0 0
        %1612 = vmatpush.bf16.msra.mxu0 %v1600
        %1613 = vmatmul.bf16.gmra.mxu0 %v1603
        %v1614 = vpop.f32.mrf.mxu0
        %v1615 = vadd.f32 0.0, %v1614
        %v1616 = vpop.f32.mrf.mxu0
        %v1617 = vadd.f32 0.0, %v1616
        %1618 = vdwg.mxu0
        %v1621 = vunpack.c.l.b16 %v1591
        %v1622 = vunpack.c.l.b16 %v1592
        %v1623 = vpack.c.b16 %v1622, %v1621
        %v1624 = vunpack.c.l.b16 %v1495
        %v1625 = vunpack.c.l.b16 %v1496
        %v1626 = vpack.c.b16 %v1625, %v1624
        %v1629 = vsel %vm960, %v1623, 0
        %1631 = vmatpush.bf16.msra.mxu0 0
        %1632 = vmatpush.bf16.msra.mxu0 0
        %1633 = vmatpush.bf16.msra.mxu0 0
        %1634 = vmatpush.bf16.msra.mxu0 0
        %1635 = vmatpush.bf16.msra.mxu0 0
        %1636 = vmatpush.bf16.msra.mxu0 0
        %1637 = vmatpush.bf16.msra.mxu0 0
        %1638 = vmatpush.bf16.msra.mxu0 %v1626
        %1639 = vmatmul.bf16.gmra.mxu0 %v1629
        %v1640 = vpop.f32.mrf.mxu0
        %v1641 = vadd.f32 0.0, %v1640
        %v1642 = vpop.f32.mrf.mxu0
        %v1643 = vadd.f32 0.0, %v1642
        %1644 = vdwg.mxu0
        %v1645 = vpack.c.bf16 %v1615, %v1615
        %v1646 = vpack.c.bf16 %v1617, %v1617
        %v1647 = vpack.c.bf16 %v1641, %v1641
        %v1648 = vpack.c.bf16 %v1643, %v1643
        %1653 = vrot.lane.b32.xlu0 %v1645, 48
        %v1654 = vpop.permute.xlu0 %1653
        %1655 = vrot.lane.b32.xlu0 %v1646, 48
        %v1656 = vpop.permute.xlu0 %1655
        %1657 = vrot.lane.b32.xlu0 %v1647, 48
        %v1658 = vpop.permute.xlu0 %1657
        %1659 = vrot.lane.b32.xlu0 %v1648, 48
        %v1660 = vpop.permute.xlu0 %1659
        %vm1665 = vcmask 519552
        %1666 = vst.msk [vmem:[#allocation2] sm:$0xf] %vm1665, %v1654
        %1667 = vst.msk [vmem:[#allocation2 + $0x4] sm:$0xf] %vm1665, %v1656
        %1668 = vst.msk [vmem:[#allocation2 + $0x8] sm:$0xf] %vm1665, %v1658
        %1669 = vst.msk [vmem:[#allocation2 + $0xc] sm:$0xf] %vm1665, %v1660
        %v1670 = vld [vmem:[#allocation2] sm:$0xf]
        %v1671 = vld [vmem:[#allocation2 + $0x4] sm:$0xf]
        %v1672 = vld [vmem:[#allocation2 + $0x8] sm:$0xf]
        %v1673 = vld [vmem:[#allocation2 + $0xc] sm:$0xf]
        %v1675 = vperm.slane %v690, 0
        %v1681 = vunpack.c.l.b16 %v1670
        %v1682 = vunpack.c.l.b16 %v1671
        %v1683 = vunpack.c.l.b16 %v1672
        %v1684 = vunpack.c.l.b16 %v1673
        %v1685 = vpack.c.b16 %v1682, %v1681
        %v1686 = vpack.c.b16 %v1684, %v1683
        %v1695 = vunpack.c.l.b16 %v682
        %v1696 = vunpack.c.l.b16 %v683
        %v1697 = vunpack.c.l.b16 %v684
        %v1698 = vunpack.c.l.b16 %v685
        %v1699 = vunpack.c.l.b16 %v686
        %v1700 = vunpack.c.l.b16 %v687
        %v1701 = vunpack.c.l.b16 %v688
        %v1702 = vunpack.c.l.b16 %v689
        %v1703 = vpack.c.b16 %v1696, %v1695
        %v1704 = vpack.c.b16 %v1698, %v1697
        %v1705 = vpack.c.b16 %v1700, %v1699
        %v1706 = vpack.c.b16 %v1702, %v1701
        %v1712 = vsel %vm733, %v1685, 0
        %v1715 = vsel %vm733, %v1686, 0
        %1717 = vmatpush.bf16.msra.mxu0 0
        %1718 = vmatpush.bf16.msra.mxu0 0
        %1719 = vmatpush.bf16.msra.mxu0 0
        %1720 = vmatpush.bf16.msra.mxu0 0
        %1721 = vmatpush.bf16.msra.mxu0 %v1706
        %1722 = vmatpush.bf16.msra.mxu0 %v1705
        %1723 = vmatpush.bf16.msra.mxu0 %v1704
        %1724 = vmatpush.bf16.msra.mxu0 %v1703
        %1725 = vmatmul.bf16.gmra.mxu0 %v1712
        %v1726 = vpop.f32.mrf.mxu0
        %v1727 = vadd.f32 %v1675, %v1726
        %v1728 = vpop.f32.mrf.mxu0
        %v1729 = vadd.f32 %v1675, %v1728
        %1730 = vmatmul.bf16.gmra.mxu0 %v1715
        %v1731 = vpop.f32.mrf.mxu0
        %v1732 = vadd.f32 %v1675, %v1731
        %v1733 = vpop.f32.mrf.mxu0
        %v1734 = vadd.f32 %v1675, %v1733
        %1735 = vdwg.mxu0
        %v1736 = vadd.f32 %v665, %v1727
        %v1737 = vadd.f32 %v666, %v1729
        %v1738 = vadd.f32 %v667, %v1732
        %v1739 = vadd.f32 %v668, %v1734
        %v1740 = vsel %vm733, %v1736, 0.0
        %1741 = vadd.xlane.f32.xlu0 %v1740
        %v1742 = vpop.xlane.xlu0 %1741
        %v1743 = vsel %vm733, %v1737, 0.0
        %1744 = vadd.xlane.f32.xlu0 %v1743
        %v1745 = vpop.xlane.xlu0 %1744
        %v1746 = vsel %vm733, %v1738, 0.0
        %1747 = vadd.xlane.f32.xlu0 %v1746
        %v1748 = vpop.xlane.xlu0 %1747
        %v1749 = vsel %vm733, %v1739, 0.0
        %1750 = vadd.xlane.f32.xlu0 %v1749
        %v1751 = vpop.xlane.xlu0 %1750
        %v1752 = vmul.f32 %v1742, %v752
        %v1753 = vmul.f32 %v1745, %v752
        %v1754 = vmul.f32 %v1748, %v752
        %v1755 = vmul.f32 %v1751, %v752
        %v1756 = vsub.f32 %v1736, %v1752
        %v1757 = vsub.f32 %v1737, %v1753
        %v1758 = vsub.f32 %v1738, %v1754
        %v1759 = vsub.f32 %v1739, %v1755
        %v1760 = vmul.f32 %v1756, %v1756
        %v1761 = vmul.f32 %v1757, %v1757
        %v1762 = vmul.f32 %v1758, %v1758
        %v1763 = vmul.f32 %v1759, %v1759
        %v1764 = vsel %vm733, %v1760, 0.0
        %1765 = vadd.xlane.f32.xlu0 %v1764
        %v1766 = vpop.xlane.xlu0 %1765
        %v1767 = vsel %vm733, %v1761, 0.0
        %1768 = vadd.xlane.f32.xlu0 %v1767
        %v1769 = vpop.xlane.xlu0 %1768
        %v1770 = vsel %vm733, %v1762, 0.0
        %1771 = vadd.xlane.f32.xlu0 %v1770
        %v1772 = vpop.xlane.xlu0 %1771
        %v1773 = vsel %vm733, %v1763, 0.0
        %1774 = vadd.xlane.f32.xlu0 %v1773
        %v1775 = vpop.xlane.xlu0 %1774
        %v1776 = vmul.f32 %v1766, %v752
        %v1777 = vmul.f32 %v1769, %v752
        %v1778 = vmul.f32 %v1772, %v752
        %v1779 = vmul.f32 %v1775, %v752
        %v1780 = vadd.f32 %v1776, 1e-05
        %v1781 = vadd.f32 %v1777, 1e-05
        %v1782 = vadd.f32 %v1778, 1e-05
        %v1783 = vadd.f32 %v1779, 1e-05
        %v1784 = vrsqrt.pop %v1780
        %v1785 = vmul.f32 %v1784, %v1780
        %v1786 = vmul.f32 %v1785, %v1784
        %v1787 = vmul.f32 0.5, %v1786
        %v1788 = vsub.f32 1.5, %v1787
        %v1789 = vmul.f32 %v1784, %v1788
        %vm1790 = vweird.f32 %v1780
        %vm1791 = vweird.f32 %v1784
        %vm1792 = vmor %vm1790, %vm1791
        %v1793 = vsel %vm1792, %v1784, %v1789
        %v1794 = vrsqrt.pop %v1781
        %v1795 = vmul.f32 %v1794, %v1781
        %v1796 = vmul.f32 %v1795, %v1794
        %v1797 = vmul.f32 0.5, %v1796
        %v1798 = vsub.f32 1.5, %v1797
        %v1799 = vmul.f32 %v1794, %v1798
        %vm1800 = vweird.f32 %v1781
        %vm1801 = vweird.f32 %v1794
        %vm1802 = vmor %vm1800, %vm1801
        %v1803 = vsel %vm1802, %v1794, %v1799
        %v1804 = vrsqrt.pop %v1782
        %v1805 = vmul.f32 %v1804, %v1782
        %v1806 = vmul.f32 %v1805, %v1804
        %v1807 = vmul.f32 0.5, %v1806
        %v1808 = vsub.f32 1.5, %v1807
        %v1809 = vmul.f32 %v1804, %v1808
        %vm1810 = vweird.f32 %v1782
        %vm1811 = vweird.f32 %v1804
        %vm1812 = vmor %vm1810, %vm1811
        %v1813 = vsel %vm1812, %v1804, %v1809
        %v1814 = vrsqrt.pop %v1783
        %v1815 = vmul.f32 %v1814, %v1783
        %v1816 = vmul.f32 %v1815, %v1814
        %v1817 = vmul.f32 0.5, %v1816
        %v1818 = vsub.f32 1.5, %v1817
        %v1819 = vmul.f32 %v1814, %v1818
        %vm1820 = vweird.f32 %v1783
        %vm1821 = vweird.f32 %v1814
        %vm1822 = vmor %vm1820, %vm1821
        %v1823 = vsel %vm1822, %v1814, %v1819
        %v1824 = vmul.f32 %v1756, %v1793
        %v1825 = vmul.f32 %v1757, %v1803
        %v1826 = vmul.f32 %v1758, %v1813
        %v1827 = vmul.f32 %v1759, %v1823
        %v1829 = vperm.slane %v671, 0
        %v1831 = vmul.f32 %v1824, %v1829
        %v1832 = vmul.f32 %v1825, %v1829
        %v1833 = vmul.f32 %v1826, %v1829
        %v1834 = vmul.f32 %v1827, %v1829
        %v1836 = vperm.slane %v672, 0
        %v1838 = vadd.f32 %v1831, %v1836
        %v1839 = vadd.f32 %v1832, %v1836
        %v1840 = vadd.f32 %v1833, %v1836
        %v1841 = vadd.f32 %v1834, %v1836
        %v1842 = vpack.c.bf16 %v1839, %v1838
        %v1843 = vpack.c.bf16 %v1841, %v1840
        %v1845 = vperm.slane %v699, 0
        %v1846 = vperm.slane %v699, 1
        %v1857 = vunpack.c.l.b16 %v691
        %v1858 = vunpack.c.h.b16 %v691
        %v1859 = vunpack.c.l.b16 %v692
        %v1860 = vunpack.c.h.b16 %v692
        %v1861 = vunpack.c.l.b16 %v693
        %v1862 = vunpack.c.h.b16 %v693
        %v1863 = vunpack.c.l.b16 %v694
        %v1864 = vunpack.c.h.b16 %v694
        %v1865 = vunpack.c.l.b16 %v695
        %v1866 = vunpack.c.h.b16 %v695
        %v1867 = vunpack.c.l.b16 %v696
        %v1868 = vunpack.c.h.b16 %v696
        %v1869 = vunpack.c.l.b16 %v697
        %v1870 = vunpack.c.h.b16 %v697
        %v1871 = vunpack.c.l.b16 %v698
        %v1872 = vunpack.c.h.b16 %v698
        %v1873 = vpack.c.b16 %v1859, %v1857
        %v1874 = vpack.c.b16 %v1860, %v1858
        %v1875 = vpack.c.b16 %v1863, %v1861
        %v1876 = vpack.c.b16 %v1864, %v1862
        %v1877 = vpack.c.b16 %v1867, %v1865
        %v1878 = vpack.c.b16 %v1868, %v1866
        %v1879 = vpack.c.b16 %v1871, %v1869
        %v1880 = vpack.c.b16 %v1872, %v1870
        %v1890 = vsel %vm733, %v1842, 0
        %v1893 = vsel %vm733, %v1843, 0
        %1895 = vmatpush.bf16.msra.mxu0 0
        %1896 = vmatpush.bf16.msra.mxu0 0
        %1897 = vmatpush.bf16.msra.mxu0 0
        %1898 = vmatpush.bf16.msra.mxu0 0
        %1899 = vmatpush.bf16.msra.mxu0 %v1879
        %1900 = vmatpush.bf16.msra.mxu0 %v1877
        %1901 = vmatpush.bf16.msra.mxu0 %v1875
        %1902 = vmatpush.bf16.msra.mxu0 %v1873
        %1903 = vmatmul.bf16.gmra.mxu0 %v1890
        %v1904 = vpop.f32.mrf.mxu0
        %v1905 = vadd.f32 %v1845, %v1904
        %v1906 = vpop.f32.mrf.mxu0
        %v1907 = vadd.f32 %v1845, %v1906
        %1908 = vmatmul.bf16.gmra.mxu0 %v1893
        %v1909 = vpop.f32.mrf.mxu0
        %v1910 = vadd.f32 %v1845, %v1909
        %v1911 = vpop.f32.mrf.mxu0
        %v1912 = vadd.f32 %v1845, %v1911
        %1913 = vdwg.mxu0
        %1914 = vmatpush.bf16.msra.mxu0 0
        %1915 = vmatpush.bf16.msra.mxu0 0
        %1916 = vmatpush.bf16.msra.mxu0 0
        %1917 = vmatpush.bf16.msra.mxu0 0
        %1918 = vmatpush.bf16.msra.mxu0 %v1880
        %1919 = vmatpush.bf16.msra.mxu0 %v1878
        %1920 = vmatpush.bf16.msra.mxu0 %v1876
        %1921 = vmatpush.bf16.msra.mxu0 %v1874
        %1922 = vmatmul.bf16.gmra.mxu0 %v1890
        %v1923 = vpop.f32.mrf.mxu0
        %v1924 = vadd.f32 %v1846, %v1923
        %v1925 = vpop.f32.mrf.mxu0
        %v1926 = vadd.f32 %v1846, %v1925
        %1927 = vmatmul.bf16.gmra.mxu0 %v1893
        %v1928 = vpop.f32.mrf.mxu0
        %v1929 = vadd.f32 %v1846, %v1928
        %v1930 = vpop.f32.mrf.mxu0
        %v1931 = vadd.f32 %v1846, %v1930
        %1932 = vdwg.mxu0
        %v1933 = vmul.f32 %v1905, 0.5
        %v1934 = vmul.f32 %v1924, 0.5
        %v1935 = vmul.f32 %v1907, 0.5
        %v1936 = vmul.f32 %v1926, 0.5
        %v1937 = vmul.f32 %v1910, 0.5
        %v1938 = vmul.f32 %v1929, 0.5
        %v1939 = vmul.f32 %v1912, 0.5
        %v1940 = vmul.f32 %v1931, 0.5
        %v1941 = vmul.f32 %v1905, 0.044715
        %v1942 = vmul.f32 %v1924, 0.044715
        %v1943 = vmul.f32 %v1907, 0.044715
        %v1944 = vmul.f32 %v1926, 0.044715
        %v1945 = vmul.f32 %v1910, 0.044715
        %v1946 = vmul.f32 %v1929, 0.044715
        %v1947 = vmul.f32 %v1912, 0.044715
        %v1948 = vmul.f32 %v1931, 0.044715
        %v1949 = vmul.f32 %v1941, %v1905
        %v1950 = vmul.f32 %v1942, %v1924
        %v1951 = vmul.f32 %v1943, %v1907
        %v1952 = vmul.f32 %v1944, %v1926
        %v1953 = vmul.f32 %v1945, %v1910
        %v1954 = vmul.f32 %v1946, %v1929
        %v1955 = vmul.f32 %v1947, %v1912
        %v1956 = vmul.f32 %v1948, %v1931
        %v1957 = vmul.f32 %v1949, %v1905
        %v1958 = vmul.f32 %v1950, %v1924
        %v1959 = vmul.f32 %v1951, %v1907
        %v1960 = vmul.f32 %v1952, %v1926
        %v1961 = vmul.f32 %v1953, %v1910
        %v1962 = vmul.f32 %v1954, %v1929
        %v1963 = vmul.f32 %v1955, %v1912
        %v1964 = vmul.f32 %v1956, %v1931
        %v1965 = vadd.f32 %v1905, %v1957
        %v1966 = vadd.f32 %v1924, %v1958
        %v1967 = vadd.f32 %v1907, %v1959
        %v1968 = vadd.f32 %v1926, %v1960
        %v1969 = vadd.f32 %v1910, %v1961
        %v1970 = vadd.f32 %v1929, %v1962
        %v1971 = vadd.f32 %v1912, %v1963
        %v1972 = vadd.f32 %v1931, %v1964
        %v1973 = vmul.f32 %v1965, 0.7978846
        %v1974 = vmul.f32 %v1966, 0.7978846
        %v1975 = vmul.f32 %v1967, 0.7978846
        %v1976 = vmul.f32 %v1968, 0.7978846
        %v1977 = vmul.f32 %v1969, 0.7978846
        %v1978 = vmul.f32 %v1970, 0.7978846
        %v1979 = vmul.f32 %v1971, 0.7978846
        %v1980 = vmul.f32 %v1972, 0.7978846
        %v1981 = vtanh.pop %v1973
        %v1982 = vtanh.pop %v1974
        %v1983 = vtanh.pop %v1975
        %v1984 = vtanh.pop %v1976
        %v1985 = vtanh.pop %v1977
        %v1986 = vtanh.pop %v1978
        %v1987 = vtanh.pop %v1979
        %v1988 = vtanh.pop %v1980
        %v1989 = vadd.f32 %v1981, 1.0
        %v1990 = vadd.f32 %v1982, 1.0
        %v1991 = vadd.f32 %v1983, 1.0
        %v1992 = vadd.f32 %v1984, 1.0
        %v1993 = vadd.f32 %v1985, 1.0
        %v1994 = vadd.f32 %v1986, 1.0
        %v1995 = vadd.f32 %v1987, 1.0
        %v1996 = vadd.f32 %v1988, 1.0
        %v1997 = vmul.f32 %v1933, %v1989
        %v1998 = vmul.f32 %v1934, %v1990
        %v1999 = vmul.f32 %v1935, %v1991
        %v2000 = vmul.f32 %v1936, %v1992
        %v2001 = vmul.f32 %v1937, %v1993
        %v2002 = vmul.f32 %v1938, %v1994
        %v2003 = vmul.f32 %v1939, %v1995
        %v2004 = vmul.f32 %v1940, %v1996
        %v2005 = vpack.c.bf16 %v1999, %v1997
        %v2006 = vpack.c.bf16 %v2000, %v1998
        %v2007 = vpack.c.bf16 %v2003, %v2001
        %v2008 = vpack.c.bf16 %v2004, %v2002
        %v2010 = vperm.slane %v732, 0
        %v2044 = vunpack.c.l.b16 %v700
        %v2045 = vunpack.c.l.b16 %v701
        %v2046 = vunpack.c.l.b16 %v702
        %v2047 = vunpack.c.l.b16 %v703
        %v2048 = vunpack.c.l.b16 %v704
        %v2049 = vunpack.c.l.b16 %v705
        %v2050 = vunpack.c.l.b16 %v706
        %v2051 = vunpack.c.l.b16 %v707
        %v2052 = vunpack.c.l.b16 %v708
        %v2053 = vunpack.c.l.b16 %v709
        %v2054 = vunpack.c.l.b16 %v710
        %v2055 = vunpack.c.l.b16 %v711
        %v2056 = vunpack.c.l.b16 %v712
        %v2057 = vunpack.c.l.b16 %v713
        %v2058 = vunpack.c.l.b16 %v714
        %v2059 = vunpack.c.l.b16 %v715
        %v2060 = vunpack.c.l.b16 %v716
        %v2061 = vunpack.c.l.b16 %v717
        %v2062 = vunpack.c.l.b16 %v718
        %v2063 = vunpack.c.l.b16 %v719
        %v2064 = vunpack.c.l.b16 %v720
        %v2065 = vunpack.c.l.b16 %v721
        %v2066 = vunpack.c.l.b16 %v722
        %v2067 = vunpack.c.l.b16 %v723
        %v2068 = vunpack.c.l.b16 %v724
        %v2069 = vunpack.c.l.b16 %v725
        %v2070 = vunpack.c.l.b16 %v726
        %v2071 = vunpack.c.l.b16 %v727
        %v2072 = vunpack.c.l.b16 %v728
        %v2073 = vunpack.c.l.b16 %v729
        %v2074 = vunpack.c.l.b16 %v730
        %v2075 = vunpack.c.l.b16 %v731
        %v2076 = vpack.c.b16 %v2045, %v2044
        %v2077 = vpack.c.b16 %v2047, %v2046
        %v2078 = vpack.c.b16 %v2049, %v2048
        %v2079 = vpack.c.b16 %v2051, %v2050
        %v2080 = vpack.c.b16 %v2053, %v2052
        %v2081 = vpack.c.b16 %v2055, %v2054
        %v2082 = vpack.c.b16 %v2057, %v2056
        %v2083 = vpack.c.b16 %v2059, %v2058
        %v2084 = vpack.c.b16 %v2061, %v2060
        %v2085 = vpack.c.b16 %v2063, %v2062
        %v2086 = vpack.c.b16 %v2065, %v2064
        %v2087 = vpack.c.b16 %v2067, %v2066
        %v2088 = vpack.c.b16 %v2069, %v2068
        %v2089 = vpack.c.b16 %v2071, %v2070
        %v2090 = vpack.c.b16 %v2073, %v2072
        %v2091 = vpack.c.b16 %v2075, %v2074
        %2108 = vmatpush.bf16.msra.mxu0 %v2083
        %2109 = vmatpush.bf16.msra.mxu0 %v2082
        %2110 = vmatpush.bf16.msra.mxu0 %v2081
        %2111 = vmatpush.bf16.msra.mxu0 %v2080
        %2112 = vmatpush.bf16.msra.mxu0 %v2079
        %2113 = vmatpush.bf16.msra.mxu0 %v2078
        %2114 = vmatpush.bf16.msra.mxu0 %v2077
        %2115 = vmatpush.bf16.msra.mxu0 %v2076
        %2116 = vmatmul.bf16.gmra.mxu0 %v2005
        %v2117 = vpop.f32.mrf.mxu0
        %v2118 = vadd.f32 %v2010, %v2117
        %v2119 = vpop.f32.mrf.mxu0
        %v2120 = vadd.f32 %v2010, %v2119
        %2121 = vmatmul.bf16.gmra.mxu0 %v2007
        %v2122 = vpop.f32.mrf.mxu0
        %v2123 = vadd.f32 %v2010, %v2122
        %v2124 = vpop.f32.mrf.mxu0
        %v2125 = vadd.f32 %v2010, %v2124
        %2126 = vdwg.mxu0
        %2127 = vmatpush.bf16.msra.mxu0 %v2091
        %2128 = vmatpush.bf16.msra.mxu0 %v2090
        %2129 = vmatpush.bf16.msra.mxu0 %v2089
        %2130 = vmatpush.bf16.msra.mxu0 %v2088
        %2131 = vmatpush.bf16.msra.mxu0 %v2087
        %2132 = vmatpush.bf16.msra.mxu0 %v2086
        %2133 = vmatpush.bf16.msra.mxu0 %v2085
        %2134 = vmatpush.bf16.msra.mxu0 %v2084
        %2135 = vmatmul.bf16.gmra.mxu0 %v2006
        %v2136 = vpop.f32.mrf.mxu0
        %v2137 = vadd.f32 %v2118, %v2136
        %v2138 = vpop.f32.mrf.mxu0
        %v2139 = vadd.f32 %v2120, %v2138
        %2140 = vmatmul.bf16.gmra.mxu0 %v2008
        %v2141 = vpop.f32.mrf.mxu0
        %v2142 = vadd.f32 %v2123, %v2141
        %v2143 = vpop.f32.mrf.mxu0
        %v2144 = vadd.f32 %v2125, %v2143
        %2145 = vdwg.mxu0
        %v2146 = vadd.f32 %v1736, %v2137
        %v2147 = vadd.f32 %v1737, %v2139
        %v2148 = vadd.f32 %v1738, %v2142
        %v2149 = vadd.f32 %v1739, %v2144
        %p2150 = scmp.lt.s32.totalorder %s27, 1
        // Predicated region
        $region100: #{tpu_custom_call.1} parent=75 // pred_check
          %p2151 = pneg %p2150
        $region101: #{tpu_custom_call.1} parent=75 // pred_check_branch
          %2153 = sbr.rel (%p2151) target = $region103
        $region102: #{tpu_custom_call.1} parent=75 // pred_region
          %2154 = vst.msk [vmem:[#allocation4] sm:$0xff] %vm733, %v2146
          %2155 = vst.msk [vmem:[#allocation4 + $0x8] sm:$0xff] %vm733, %v2147
          %2156 = vst.msk [vmem:[#allocation4 + $0x10] sm:$0xff] %vm733, %v2148
          %2157 = vst.msk [vmem:[#allocation4 + $0x18] sm:$0xff] %vm733, %v2149
        $region103: #{tpu_custom_call.1} parent=75 // pred_fallthru
          _
        %p2158 = scmp.eq.s32.totalorder %s27, 1
        // Predicated region
        $region104: #{tpu_custom_call.1} parent=75 // pred_check
          %p2159 = pneg %p2158
        $region105: #{tpu_custom_call.1} parent=75 // pred_check_branch
          %2161 = sbr.rel (%p2159) target = $region107
        $region106: #{tpu_custom_call.1} parent=75 // pred_region
          %v2162 = vld [vmem:[%s13] sm:$0x1]
          %v2163 = vld [vmem:[%s14] sm:$0x1]
          %v2164 = vsel %vm733, %v2146, 0.0
          %2165 = vadd.xlane.f32.xlu0 %v2164
          %v2166 = vpop.xlane.xlu0 %2165
          %v2167 = vsel %vm733, %v2147, 0.0
          %2168 = vadd.xlane.f32.xlu0 %v2167
          %v2169 = vpop.xlane.xlu0 %2168
          %v2170 = vsel %vm733, %v2148, 0.0
          %2171 = vadd.xlane.f32.xlu0 %v2170
          %v2172 = vpop.xlane.xlu0 %2171
          %v2173 = vsel %vm733, %v2149, 0.0
          %2174 = vadd.xlane.f32.xlu0 %v2173
          %v2175 = vpop.xlane.xlu0 %2174
          %v2176 = vmul.f32 %v2166, %v752
          %v2177 = vmul.f32 %v2169, %v752
          %v2178 = vmul.f32 %v2172, %v752
          %v2179 = vmul.f32 %v2175, %v752
          %v2180 = vsub.f32 %v2146, %v2176
          %v2181 = vsub.f32 %v2147, %v2177
          %v2182 = vsub.f32 %v2148, %v2178
          %v2183 = vsub.f32 %v2149, %v2179
          %v2184 = vmul.f32 %v2180, %v2180
          %v2185 = vmul.f32 %v2181, %v2181
          %v2186 = vmul.f32 %v2182, %v2182
          %v2187 = vmul.f32 %v2183, %v2183
          %v2188 = vsel %vm733, %v2184, 0.0
          %2189 = vadd.xlane.f32.xlu0 %v2188
          %v2190 = vpop.xlane.xlu0 %2189
          %v2191 = vsel %vm733, %v2185, 0.0
          %2192 = vadd.xlane.f32.xlu0 %v2191
          %v2193 = vpop.xlane.xlu0 %2192
          %v2194 = vsel %vm733, %v2186, 0.0
          %2195 = vadd.xlane.f32.xlu0 %v2194
          %v2196 = vpop.xlane.xlu0 %2195
          %v2197 = vsel %vm733, %v2187, 0.0
          %2198 = vadd.xlane.f32.xlu0 %v2197
          %v2199 = vpop.xlane.xlu0 %2198
          %v2200 = vmul.f32 %v2190, %v752
          %v2201 = vmul.f32 %v2193, %v752
          %v2202 = vmul.f32 %v2196, %v752
          %v2203 = vmul.f32 %v2199, %v752
          %v2204 = vadd.f32 %v2200, 1e-05
          %v2205 = vadd.f32 %v2201, 1e-05
          %v2206 = vadd.f32 %v2202, 1e-05
          %v2207 = vadd.f32 %v2203, 1e-05
          %v2208 = vrsqrt.pop %v2204
          %v2209 = vmul.f32 %v2208, %v2204
          %v2210 = vmul.f32 %v2209, %v2208
          %v2211 = vmul.f32 0.5, %v2210
          %v2212 = vsub.f32 1.5, %v2211
          %v2213 = vmul.f32 %v2208, %v2212
          %vm2214 = vweird.f32 %v2204
          %vm2215 = vweird.f32 %v2208
          %vm2216 = vmor %vm2214, %vm2215
          %v2217 = vsel %vm2216, %v2208, %v2213
          %v2218 = vrsqrt.pop %v2205
          %v2219 = vmul.f32 %v2218, %v2205
          %v2220 = vmul.f32 %v2219, %v2218
          %v2221 = vmul.f32 0.5, %v2220
          %v2222 = vsub.f32 1.5, %v2221
          %v2223 = vmul.f32 %v2218, %v2222
          %vm2224 = vweird.f32 %v2205
          %vm2225 = vweird.f32 %v2218
          %vm2226 = vmor %vm2224, %vm2225
          %v2227 = vsel %vm2226, %v2218, %v2223
          %v2228 = vrsqrt.pop %v2206
          %v2229 = vmul.f32 %v2228, %v2206
          %v2230 = vmul.f32 %v2229, %v2228
          %v2231 = vmul.f32 0.5, %v2230
          %v2232 = vsub.f32 1.5, %v2231
          %v2233 = vmul.f32 %v2228, %v2232
          %vm2234 = vweird.f32 %v2206
          %vm2235 = vweird.f32 %v2228
          %vm2236 = vmor %vm2234, %vm2235
          %v2237 = vsel %vm2236, %v2228, %v2233
          %v2238 = vrsqrt.pop %v2207
          %v2239 = vmul.f32 %v2238, %v2207
          %v2240 = vmul.f32 %v2239, %v2238
          %v2241 = vmul.f32 0.5, %v2240
          %v2242 = vsub.f32 1.5, %v2241
          %v2243 = vmul.f32 %v2238, %v2242
          %vm2244 = vweird.f32 %v2207
          %vm2245 = vweird.f32 %v2238
          %vm2246 = vmor %vm2244, %vm2245
          %v2247 = vsel %vm2246, %v2238, %v2243
          %v2248 = vmul.f32 %v2180, %v2217
          %v2249 = vmul.f32 %v2181, %v2227
          %v2250 = vmul.f32 %v2182, %v2237
          %v2251 = vmul.f32 %v2183, %v2247
          %v2253 = vperm.slane %v2162, 0
          %v2255 = vmul.f32 %v2248, %v2253
          %v2256 = vmul.f32 %v2249, %v2253
          %v2257 = vmul.f32 %v2250, %v2253
          %v2258 = vmul.f32 %v2251, %v2253
          %v2260 = vperm.slane %v2163, 0
          %v2262 = vadd.f32 %v2255, %v2260
          %v2263 = vadd.f32 %v2256, %v2260
          %v2264 = vadd.f32 %v2257, %v2260
          %v2265 = vadd.f32 %v2258, %v2260
          %2266 = vst.msk [vmem:[#allocation4] sm:$0xff] %vm733, %v2262
          %2267 = vst.msk [vmem:[#allocation4 + $0x8] sm:$0xff] %vm733, %v2263
          %2268 = vst.msk [vmem:[#allocation4 + $0x10] sm:$0xff] %vm733, %v2264
          %2269 = vst.msk [vmem:[#allocation4 + $0x18] sm:$0xff] %vm733, %v2265
        $region107: #{tpu_custom_call.1} parent=75 // pred_fallthru
          _
        // Predicated region
        $region108: #{tpu_custom_call.1} parent=75 // pred_check
          %p2270 = pneg %p394
        $region109: #{tpu_custom_call.1} parent=75 // pred_check_branch
          %2272 = sbr.rel (%p2270) target = $region111
        $region110: #{tpu_custom_call.1} parent=75 // pred_region
          %2274 = vsyncadd [#allocation5], 0
          %s2275 = sshll.u32 [#allocation4], 4
          %s2276 = int_to_ptr.vmem [resolvable:$true] %s2275
          %s2277 = sshll.u32 %s15, 4
          %s2278 = int_to_ptr.hbm [resolvable:$true] %s2277
          %2283 = dma.vmem_to_hbm [thread:$0]  %s2276, 512, %s2278, [#allocation5], 128, 128, 8
        $region111: #{tpu_custom_call.1} parent=75 // pred_fallthru
          _
        // Predicated region
        $region112: #{tpu_custom_call.1} parent=75 // pred_check
          %p2284 = pneg %p394
        $region113: #{tpu_custom_call.1} parent=75 // pred_check_branch
          %2286 = sbr.rel (%p2284) target = $region115
        $region114: #{tpu_custom_call.1} parent=75 // pred_region
          %2288 = dma.done [#allocation5], 512
        $region115: #{tpu_custom_call.1} parent=75 // pred_fallthru
          _
      $region76: #{tpu_custom_call.1} parent=5 // pred_fallthru
        _
      %p2289 = scmp.le.s32.totalorder 2, %s22
      // Predicated region
      $region116: #{tpu_custom_call.1} parent=5 // pred_check
        %p2290 = pneg %p2289
      $region117: #{tpu_custom_call.1} parent=5 // pred_check_branch
        %2292 = sbr.rel (%p2290) target = $region119
      $region118: #{tpu_custom_call.1} parent=5 // pred_region
        %s2293 = ssub.s32 %s22, 2
      $region119: #{tpu_custom_call.1} parent=5 // pred_fallthru
        _
    $region6: #{tpu_custom_call.1} parent=1 // loop_footer
      %s26 = sadd.s32 1, %s22
    $region7: #{tpu_custom_call.1} parent=1 // loop_footer_branch
      %21 = sbr.rel target = $region3
    $region8: #{tpu_custom_call.1} parent=1 // loop_exit
      _
    %2294 = vsyncpa [#allocation5], 1
    %s2295 = scalar_lea.sflag [#allocation5], 1
    %2296 = vsyncpa %s2295, 1
  %2297 = vsyncmov [#allocation3]
  %s2298 = vpop.sfrf %2297
  %p2299 = scmp.eq.s32.totalorder %s2298, 0
  %p2300 = pneg %p2299
  %2302 = shalt.err (%p2300)

</llo_original>
